<compile_context>
chip_gen: v7x
topology: tpu7x:2x2x1
jax: 0.10.0
libtpu: 0.0.40
codegen_flags: <defaults>
</compile_context>

<pallas_src>
import jax
import jax.numpy as jnp
from jax import lax
from jax.experimental import pallas as pl
from jax.experimental.pallas import tpu as pltpu

hidden_size = 10
input_size = 2
output_size = 1

LANE = 128
ROW_TILE_BASE = 8 * LANE          # 1024: keeps the sublane dim a multiple of 8
MAX_TILE_M = 8192                 # sweepable; 8192..32768 all fit VMEM budgets

# Offsets of each parameter inside the packed flat f32 vector (SMEM resident).
OFF_W1 = 0
OFF_B1 = OFF_W1 + hidden_size * input_size
OFF_W2 = OFF_B1 + hidden_size
OFF_B2 = OFF_W2 + hidden_size * hidden_size
OFF_W3 = OFF_B2 + hidden_size
OFF_B3 = OFF_W3 + hidden_size * hidden_size
OFF_W4 = OFF_B3 + hidden_size
OFF_B4 = OFF_W4 + output_size * hidden_size
N_PARAMS = OFF_B4 + output_size   # 261 scalars


def mlp_kernel(p_ref, x_ref, o_ref):
    """VPU broadcast-FMA MLP.

    p_ref : SMEM f32[N_PARAMS]                 packed weights+biases (torch layout)
    x_ref : VMEM f32[input_size,  T, 128]      per-feature dense activation planes
    o_ref : VMEM f32[output_size, T, 128]      (T = tile_m // 128)
    """

    def dense(acts, w_off, b_off, n_in, n_out, relu):
        # h[j] = (relu)( b[j] + sum_k w[j,k] * acts[k] ), fully unrolled:
        # dims are the compile-time constants 2/10/10/1, so this is ~230
        # scalar*plane FMAs on the 4 VALU slots; weight scalars come from SMEM.
        outs = []
        for j in range(n_out):
            acc = acts[0] * p_ref[w_off + j * n_in]
            for k in range(1, n_in):
                acc = acc + acts[k] * p_ref[w_off + j * n_in + k]
            acc = acc + p_ref[b_off + j]
            outs.append(jnp.maximum(acc, 0.0) if relu else acc)
        return outs

    acts = [x_ref[k] for k in range(input_size)]                 # [T,128] each
    acts = dense(acts, OFF_W1, OFF_B1, input_size, hidden_size, True)    # fc1+ReLU
    acts = dense(acts, OFF_W2, OFF_B2, hidden_size, hidden_size, True)   # fc2+ReLU
    acts = dense(acts, OFF_W3, OFF_B3, hidden_size, hidden_size, True)   # fc3+ReLU
    acts = dense(acts, OFF_W4, OFF_B4, hidden_size, output_size, False)  # fc4

    for j in range(output_size):
        o_ref[j] = acts[j].astype(o_ref.dtype)                   # lane-dense store


@jax.jit
def mlp_forward(x, packed_params):
    """x: [B, S, input_size] float32 -> [B, S, output_size] float32."""
    B, S, F = x.shape
    assert F == input_size
    M = B * S

    # Row tile: multiple of 1024 so the sublane dim (tile_m/128) is a multiple
    # of 8; capped at MAX_TILE_M (per-step VMEM ~1.5 MiB, fits every chip).
    tile_m = min(MAX_TILE_M, pl.cdiv(M, ROW_TILE_BASE) * ROW_TILE_BASE)
    m_pad = pl.cdiv(M, tile_m) * tile_m
    tm128 = tile_m // LANE
    n_tiles = m_pad // tile_m

    # Feature-major view of the input (the one real copy; pad fuses into it).
    x_t = x.reshape(M, F).T                              # [F, M]
    if m_pad != M:
        x_t = jnp.pad(x_t, ((0, 0), (0, m_pad - M)))     # padded rows sliced off below
    x_t3 = x_t.reshape(F, m_pad // LANE, LANE)           # free reshape -> dense planes

    flops_per_row = 2 * (input_size * hidden_size
                         + 2 * hidden_size * hidden_size
                         + hidden_size * output_size)

    out3 = pl.pallas_call(
        mlp_kernel,
        out_shape=jax.ShapeDtypeStruct((output_size, m_pad // LANE, LANE), jnp.float32),
        grid=(n_tiles,),
        in_specs=[
            # Packed weights/biases: whole (tiny) array resident in SMEM.
            pl.BlockSpec(memory_space=pltpu.MemorySpace.SMEM),
            # Activations: per-feature dense [tm128, 128] planes, tiled over M.
            pl.BlockSpec((input_size, tm128, LANE), lambda i: (0, i, 0)),
        ],
        out_specs=pl.BlockSpec((output_size, tm128, LANE), lambda i: (0, i, 0)),
        compiler_params=pltpu.CompilerParams(
            # Independent row tiles; on v7x CORE_PARALLEL/core_map would split
            # these across the two TensorCores (kept portable here).
            dimension_semantics=("parallel",)),
        cost_estimate=pl.CostEstimate(
            flops=flops_per_row * m_pad,
            transcendentals=0,
            bytes_accessed=4 * m_pad * (input_size + output_size) + 4 * N_PARAMS),
    )(packed_params, x_t3)

    out = out3.reshape(output_size, m_pad)[:, :M]        # drop padded rows
    return out.T.reshape(B, S, output_size)              # degenerate transpose: free


def init_params(key):
    """Deterministic init mimicking torch.nn.Linear (uniform(+/- 1/sqrt(fan_in))).

    Weights kept in torch layout [out_features, in_features]; biases [out].
    """
    def linear(k, fan_in, fan_out):
        kw, kb = jax.random.split(k)
        bound = 1.0 / (fan_in ** 0.5)
        w = jax.random.uniform(kw, (fan_out, fan_in), jnp.float32, -bound, bound)
        b = jax.random.uniform(kb, (fan_out,), jnp.float32, -bound, bound)
        return w, b

    k1, k2, k3, k4 = jax.random.split(key, 4)
    w1, b1 = linear(k1, input_size, hidden_size)
    w2, b2 = linear(k2, hidden_size, hidden_size)
    w3, b3 = linear(k3, hidden_size, hidden_size)
    w4, b4 = linear(k4, hidden_size, output_size)
    return (w1, b1, w2, b2, w3, b3, w4, b4)


def pack_params(params):
    """Flatten all weights/biases into one f32 vector (SMEM operand)."""
    flat = jnp.concatenate([p.ravel() for p in params]).astype(jnp.float32)
    assert flat.shape[0] == N_PARAMS
    return flat


def mlp_reference(x, params):
    """Pure-JAX reference of the same math (torch-layout weights), exact f32."""
    w1, b1, w2, b2, w3, b3, w4, b4 = params
    hi = lax.Precision.HIGHEST
    h = jnp.maximum(jnp.dot(x, w1.T, precision=hi) + b1, 0.0)
    h = jnp.maximum(jnp.dot(h, w2.T, precision=hi) + b2, 0.0)
    h = jnp.maximum(jnp.dot(h, w3.T, precision=hi) + b3, 0.0)
    return jnp.dot(h, w4.T, precision=hi) + b4


if __name__ == "__main__":
    key = jax.random.PRNGKey(0)
    params = init_params(key)
    packed = pack_params(params)

    # 1) Same data as the PyTorch script: XOR inputs, shape [4, 1, 2] (B, S, in).
    x_xor = jnp.array([[[0.0, 0.0]], [[0.0, 1.0]], [[1.0, 0.0]], [[1.0, 1.0]]],
                      dtype=jnp.float32)
    out_xor = jax.block_until_ready(mlp_forward(x_xor, packed))
    assert out_xor.shape == (4, 1, output_size)
    assert jnp.allclose(out_xor, mlp_reference(x_xor, params), atol=1e-5, rtol=1e-5)

    # 2) Larger batch: exercises the multi-tile, pipelined path (2 grid steps).
    x_big = jax.random.normal(jax.random.PRNGKey(1), (4, 4096, input_size),
                              dtype=jnp.float32)
    out_big = jax.block_until_ready(mlp_forward(x_big, packed))
    assert out_big.shape == (4, 4096, output_size)
    assert jnp.allclose(out_big, mlp_reference(x_big, params), atol=1e-4, rtol=1e-4)

    print("KERNEL_OK")
</pallas_src>

<mosaic_0001>
module attributes {stable_mosaic.version = 11 : i64} {
  func.func @mlp_kernel(%arg0: i32, %arg1: memref<261xf32, #tpu.memory_space<smem>>, %arg2: memref<2x8x128xf32, #tpu.memory_space<vmem>>, %arg3: memref<1x8x128xf32, #tpu.memory_space<vmem>>) attributes {dimension_semantics = [#tpu.dimension_semantics<parallel>], iteration_bounds = array<i64: 1>, scalar_prefetch = 0 : i64, scratch_operands = 0 : i64, tpu.core_type = #tpu.core_type<tc>, window_params = [{transform_indices = @transform_0, window_bounds = array<i64: 261>}, {transform_indices = @transform_1, window_bounds = array<i64: 2, 8, 128>}, {transform_indices = @transform_2, window_bounds = array<i64: 1, 8, 128>}]} {
    %c0 = arith.constant 0 : index
    %c0_0 = arith.constant 0 : index
    %c0_1 = arith.constant 0 : index
    %0 = vector.load %arg2[%c0, %c0_0, %c0_1] : memref<2x8x128xf32, #tpu.memory_space<vmem>>, vector<1x8x128xf32>
    %1 = vector.shape_cast %0 : vector<1x8x128xf32> to vector<8x128xf32>
    %c1 = arith.constant 1 : index
    %c0_2 = arith.constant 0 : index
    %c0_3 = arith.constant 0 : index
    %2 = vector.load %arg2[%c1, %c0_2, %c0_3] : memref<2x8x128xf32, #tpu.memory_space<vmem>>, vector<1x8x128xf32>
    %3 = vector.shape_cast %2 : vector<1x8x128xf32> to vector<8x128xf32>
    %c0_4 = arith.constant 0 : index
    %4 = memref.load %arg1[%c0_4] : memref<261xf32, #tpu.memory_space<smem>>
    %5 = vector.broadcast %4 : f32 to vector<8x128xf32>
    %6 = arith.mulf %1, %5 : vector<8x128xf32>
    %c1_5 = arith.constant 1 : index
    %7 = memref.load %arg1[%c1_5] : memref<261xf32, #tpu.memory_space<smem>>
    %8 = vector.broadcast %7 : f32 to vector<8x128xf32>
    %9 = arith.mulf %3, %8 : vector<8x128xf32>
    %10 = arith.addf %6, %9 : vector<8x128xf32>
    %c20 = arith.constant 20 : index
    %11 = memref.load %arg1[%c20] : memref<261xf32, #tpu.memory_space<smem>>
    %12 = vector.broadcast %11 : f32 to vector<8x128xf32>
    %13 = arith.addf %10, %12 : vector<8x128xf32>
    %cst = arith.constant 0.000000e+00 : f32
    %14 = vector.broadcast %cst : f32 to vector<8x128xf32>
    %15 = arith.maximumf %13, %14 : vector<8x128xf32>
    %c2 = arith.constant 2 : index
    %16 = memref.load %arg1[%c2] : memref<261xf32, #tpu.memory_space<smem>>
    %17 = vector.broadcast %16 : f32 to vector<8x128xf32>
    %18 = arith.mulf %1, %17 : vector<8x128xf32>
    %c3 = arith.constant 3 : index
    %19 = memref.load %arg1[%c3] : memref<261xf32, #tpu.memory_space<smem>>
    %20 = vector.broadcast %19 : f32 to vector<8x128xf32>
    %21 = arith.mulf %3, %20 : vector<8x128xf32>
    %22 = arith.addf %18, %21 : vector<8x128xf32>
    %c21 = arith.constant 21 : index
    %23 = memref.load %arg1[%c21] : memref<261xf32, #tpu.memory_space<smem>>
    %24 = vector.broadcast %23 : f32 to vector<8x128xf32>
    %25 = arith.addf %22, %24 : vector<8x128xf32>
    %cst_6 = arith.constant 0.000000e+00 : f32
    %26 = vector.broadcast %cst_6 : f32 to vector<8x128xf32>
    %27 = arith.maximumf %25, %26 : vector<8x128xf32>
    %c4 = arith.constant 4 : index
    %28 = memref.load %arg1[%c4] : memref<261xf32, #tpu.memory_space<smem>>
    %29 = vector.broadcast %28 : f32 to vector<8x128xf32>
    %30 = arith.mulf %1, %29 : vector<8x128xf32>
    %c5 = arith.constant 5 : index
    %31 = memref.load %arg1[%c5] : memref<261xf32, #tpu.memory_space<smem>>
    %32 = vector.broadcast %31 : f32 to vector<8x128xf32>
    %33 = arith.mulf %3, %32 : vector<8x128xf32>
    %34 = arith.addf %30, %33 : vector<8x128xf32>
    %c22 = arith.constant 22 : index
    %35 = memref.load %arg1[%c22] : memref<261xf32, #tpu.memory_space<smem>>
    %36 = vector.broadcast %35 : f32 to vector<8x128xf32>
    %37 = arith.addf %34, %36 : vector<8x128xf32>
    %cst_7 = arith.constant 0.000000e+00 : f32
    %38 = vector.broadcast %cst_7 : f32 to vector<8x128xf32>
    %39 = arith.maximumf %37, %38 : vector<8x128xf32>
    %c6 = arith.constant 6 : index
    %40 = memref.load %arg1[%c6] : memref<261xf32, #tpu.memory_space<smem>>
    %41 = vector.broadcast %40 : f32 to vector<8x128xf32>
    %42 = arith.mulf %1, %41 : vector<8x128xf32>
    %c7 = arith.constant 7 : index
    %43 = memref.load %arg1[%c7] : memref<261xf32, #tpu.memory_space<smem>>
    %44 = vector.broadcast %43 : f32 to vector<8x128xf32>
    %45 = arith.mulf %3, %44 : vector<8x128xf32>
    %46 = arith.addf %42, %45 : vector<8x128xf32>
    %c23 = arith.constant 23 : index
    %47 = memref.load %arg1[%c23] : memref<261xf32, #tpu.memory_space<smem>>
    %48 = vector.broadcast %47 : f32 to vector<8x128xf32>
    %49 = arith.addf %46, %48 : vector<8x128xf32>
    %cst_8 = arith.constant 0.000000e+00 : f32
    %50 = vector.broadcast %cst_8 : f32 to vector<8x128xf32>
    %51 = arith.maximumf %49, %50 : vector<8x128xf32>
    %c8 = arith.constant 8 : index
    %52 = memref.load %arg1[%c8] : memref<261xf32, #tpu.memory_space<smem>>
    %53 = vector.broadcast %52 : f32 to vector<8x128xf32>
    %54 = arith.mulf %1, %53 : vector<8x128xf32>
    %c9 = arith.constant 9 : index
    %55 = memref.load %arg1[%c9] : memref<261xf32, #tpu.memory_space<smem>>
    %56 = vector.broadcast %55 : f32 to vector<8x128xf32>
    %57 = arith.mulf %3, %56 : vector<8x128xf32>
    %58 = arith.addf %54, %57 : vector<8x128xf32>
    %c24 = arith.constant 24 : index
    %59 = memref.load %arg1[%c24] : memref<261xf32, #tpu.memory_space<smem>>
    %60 = vector.broadcast %59 : f32 to vector<8x128xf32>
    %61 = arith.addf %58, %60 : vector<8x128xf32>
    %cst_9 = arith.constant 0.000000e+00 : f32
    %62 = vector.broadcast %cst_9 : f32 to vector<8x128xf32>
    %63 = arith.maximumf %61, %62 : vector<8x128xf32>
    %c10 = arith.constant 10 : index
    %64 = memref.load %arg1[%c10] : memref<261xf32, #tpu.memory_space<smem>>
    %65 = vector.broadcast %64 : f32 to vector<8x128xf32>
    %66 = arith.mulf %1, %65 : vector<8x128xf32>
    %c11 = arith.constant 11 : index
    %67 = memref.load %arg1[%c11] : memref<261xf32, #tpu.memory_space<smem>>
    %68 = vector.broadcast %67 : f32 to vector<8x128xf32>
    %69 = arith.mulf %3, %68 : vector<8x128xf32>
    %70 = arith.addf %66, %69 : vector<8x128xf32>
    %c25 = arith.constant 25 : index
    %71 = memref.load %arg1[%c25] : memref<261xf32, #tpu.memory_space<smem>>
    %72 = vector.broadcast %71 : f32 to vector<8x128xf32>
    %73 = arith.addf %70, %72 : vector<8x128xf32>
    %cst_10 = arith.constant 0.000000e+00 : f32
    %74 = vector.broadcast %cst_10 : f32 to vector<8x128xf32>
    %75 = arith.maximumf %73, %74 : vector<8x128xf32>
    %c12 = arith.constant 12 : index
    %76 = memref.load %arg1[%c12] : memref<261xf32, #tpu.memory_space<smem>>
    %77 = vector.broadcast %76 : f32 to vector<8x128xf32>
    %78 = arith.mulf %1, %77 : vector<8x128xf32>
    %c13 = arith.constant 13 : index
    %79 = memref.load %arg1[%c13] : memref<261xf32, #tpu.memory_space<smem>>
    %80 = vector.broadcast %79 : f32 to vector<8x128xf32>
    %81 = arith.mulf %3, %80 : vector<8x128xf32>
    %82 = arith.addf %78, %81 : vector<8x128xf32>
    %c26 = arith.constant 26 : index
    %83 = memref.load %arg1[%c26] : memref<261xf32, #tpu.memory_space<smem>>
    %84 = vector.broadcast %83 : f32 to vector<8x128xf32>
    %85 = arith.addf %82, %84 : vector<8x128xf32>
    %cst_11 = arith.constant 0.000000e+00 : f32
    %86 = vector.broadcast %cst_11 : f32 to vector<8x128xf32>
    %87 = arith.maximumf %85, %86 : vector<8x128xf32>
    %c14 = arith.constant 14 : index
    %88 = memref.load %arg1[%c14] : memref<261xf32, #tpu.memory_space<smem>>
    %89 = vector.broadcast %88 : f32 to vector<8x128xf32>
    %90 = arith.mulf %1, %89 : vector<8x128xf32>
    %c15 = arith.constant 15 : index
    %91 = memref.load %arg1[%c15] : memref<261xf32, #tpu.memory_space<smem>>
    %92 = vector.broadcast %91 : f32 to vector<8x128xf32>
    %93 = arith.mulf %3, %92 : vector<8x128xf32>
    %94 = arith.addf %90, %93 : vector<8x128xf32>
    %c27 = arith.constant 27 : index
    %95 = memref.load %arg1[%c27] : memref<261xf32, #tpu.memory_space<smem>>
    %96 = vector.broadcast %95 : f32 to vector<8x128xf32>
    %97 = arith.addf %94, %96 : vector<8x128xf32>
    %cst_12 = arith.constant 0.000000e+00 : f32
    %98 = vector.broadcast %cst_12 : f32 to vector<8x128xf32>
    %99 = arith.maximumf %97, %98 : vector<8x128xf32>
    %c16 = arith.constant 16 : index
    %100 = memref.load %arg1[%c16] : memref<261xf32, #tpu.memory_space<smem>>
    %101 = vector.broadcast %100 : f32 to vector<8x128xf32>
    %102 = arith.mulf %1, %101 : vector<8x128xf32>
    %c17 = arith.constant 17 : index
    %103 = memref.load %arg1[%c17] : memref<261xf32, #tpu.memory_space<smem>>
    %104 = vector.broadcast %103 : f32 to vector<8x128xf32>
    %105 = arith.mulf %3, %104 : vector<8x128xf32>
    %106 = arith.addf %102, %105 : vector<8x128xf32>
    %c28 = arith.constant 28 : index
    %107 = memref.load %arg1[%c28] : memref<261xf32, #tpu.memory_space<smem>>
    %108 = vector.broadcast %107 : f32 to vector<8x128xf32>
    %109 = arith.addf %106, %108 : vector<8x128xf32>
    %cst_13 = arith.constant 0.000000e+00 : f32
    %110 = vector.broadcast %cst_13 : f32 to vector<8x128xf32>
    %111 = arith.maximumf %109, %110 : vector<8x128xf32>
    %c18 = arith.constant 18 : index
    %112 = memref.load %arg1[%c18] : memref<261xf32, #tpu.memory_space<smem>>
    %113 = vector.broadcast %112 : f32 to vector<8x128xf32>
    %114 = arith.mulf %1, %113 : vector<8x128xf32>
    %c19 = arith.constant 19 : index
    %115 = memref.load %arg1[%c19] : memref<261xf32, #tpu.memory_space<smem>>
    %116 = vector.broadcast %115 : f32 to vector<8x128xf32>
    %117 = arith.mulf %3, %116 : vector<8x128xf32>
    %118 = arith.addf %114, %117 : vector<8x128xf32>
    %c29 = arith.constant 29 : index
    %119 = memref.load %arg1[%c29] : memref<261xf32, #tpu.memory_space<smem>>
    %120 = vector.broadcast %119 : f32 to vector<8x128xf32>
    %121 = arith.addf %118, %120 : vector<8x128xf32>
    %cst_14 = arith.constant 0.000000e+00 : f32
    %122 = vector.broadcast %cst_14 : f32 to vector<8x128xf32>
    %123 = arith.maximumf %121, %122 : vector<8x128xf32>
    %c30 = arith.constant 30 : index
    %124 = memref.load %arg1[%c30] : memref<261xf32, #tpu.memory_space<smem>>
    %125 = vector.broadcast %124 : f32 to vector<8x128xf32>
    %126 = arith.mulf %15, %125 : vector<8x128xf32>
    %c31 = arith.constant 31 : index
    %127 = memref.load %arg1[%c31] : memref<261xf32, #tpu.memory_space<smem>>
    %128 = vector.broadcast %127 : f32 to vector<8x128xf32>
    %129 = arith.mulf %27, %128 : vector<8x128xf32>
    %130 = arith.addf %126, %129 : vector<8x128xf32>
    %c32 = arith.constant 32 : index
    %131 = memref.load %arg1[%c32] : memref<261xf32, #tpu.memory_space<smem>>
    %132 = vector.broadcast %131 : f32 to vector<8x128xf32>
    %133 = arith.mulf %39, %132 : vector<8x128xf32>
    %134 = arith.addf %130, %133 : vector<8x128xf32>
    %c33 = arith.constant 33 : index
    %135 = memref.load %arg1[%c33] : memref<261xf32, #tpu.memory_space<smem>>
    %136 = vector.broadcast %135 : f32 to vector<8x128xf32>
    %137 = arith.mulf %51, %136 : vector<8x128xf32>
    %138 = arith.addf %134, %137 : vector<8x128xf32>
    %c34 = arith.constant 34 : index
    %139 = memref.load %arg1[%c34] : memref<261xf32, #tpu.memory_space<smem>>
    %140 = vector.broadcast %139 : f32 to vector<8x128xf32>
    %141 = arith.mulf %63, %140 : vector<8x128xf32>
    %142 = arith.addf %138, %141 : vector<8x128xf32>
    %c35 = arith.constant 35 : index
    %143 = memref.load %arg1[%c35] : memref<261xf32, #tpu.memory_space<smem>>
    %144 = vector.broadcast %143 : f32 to vector<8x128xf32>
    %145 = arith.mulf %75, %144 : vector<8x128xf32>
    %146 = arith.addf %142, %145 : vector<8x128xf32>
    %c36 = arith.constant 36 : index
    %147 = memref.load %arg1[%c36] : memref<261xf32, #tpu.memory_space<smem>>
    %148 = vector.broadcast %147 : f32 to vector<8x128xf32>
    %149 = arith.mulf %87, %148 : vector<8x128xf32>
    %150 = arith.addf %146, %149 : vector<8x128xf32>
    %c37 = arith.constant 37 : index
    %151 = memref.load %arg1[%c37] : memref<261xf32, #tpu.memory_space<smem>>
    %152 = vector.broadcast %151 : f32 to vector<8x128xf32>
    %153 = arith.mulf %99, %152 : vector<8x128xf32>
    %154 = arith.addf %150, %153 : vector<8x128xf32>
    %c38 = arith.constant 38 : index
    %155 = memref.load %arg1[%c38] : memref<261xf32, #tpu.memory_space<smem>>
    %156 = vector.broadcast %155 : f32 to vector<8x128xf32>
    %157 = arith.mulf %111, %156 : vector<8x128xf32>
    %158 = arith.addf %154, %157 : vector<8x128xf32>
    %c39 = arith.constant 39 : index
    %159 = memref.load %arg1[%c39] : memref<261xf32, #tpu.memory_space<smem>>
    %160 = vector.broadcast %159 : f32 to vector<8x128xf32>
    %161 = arith.mulf %123, %160 : vector<8x128xf32>
    %162 = arith.addf %158, %161 : vector<8x128xf32>
    %c130 = arith.constant 130 : index
    %163 = memref.load %arg1[%c130] : memref<261xf32, #tpu.memory_space<smem>>
    %164 = vector.broadcast %163 : f32 to vector<8x128xf32>
    %165 = arith.addf %162, %164 : vector<8x128xf32>
    %cst_15 = arith.constant 0.000000e+00 : f32
    %166 = vector.broadcast %cst_15 : f32 to vector<8x128xf32>
    %167 = arith.maximumf %165, %166 : vector<8x128xf32>
    %c40 = arith.constant 40 : index
    %168 = memref.load %arg1[%c40] : memref<261xf32, #tpu.memory_space<smem>>
    %169 = vector.broadcast %168 : f32 to vector<8x128xf32>
    %170 = arith.mulf %15, %169 : vector<8x128xf32>
    %c41 = arith.constant 41 : index
    %171 = memref.load %arg1[%c41] : memref<261xf32, #tpu.memory_space<smem>>
    %172 = vector.broadcast %171 : f32 to vector<8x128xf32>
    %173 = arith.mulf %27, %172 : vector<8x128xf32>
    %174 = arith.addf %170, %173 : vector<8x128xf32>
    %c42 = arith.constant 42 : index
    %175 = memref.load %arg1[%c42] : memref<261xf32, #tpu.memory_space<smem>>
    %176 = vector.broadcast %175 : f32 to vector<8x128xf32>
    %177 = arith.mulf %39, %176 : vector<8x128xf32>
    %178 = arith.addf %174, %177 : vector<8x128xf32>
    %c43 = arith.constant 43 : index
    %179 = memref.load %arg1[%c43] : memref<261xf32, #tpu.memory_space<smem>>
    %180 = vector.broadcast %179 : f32 to vector<8x128xf32>
    %181 = arith.mulf %51, %180 : vector<8x128xf32>
    %182 = arith.addf %178, %181 : vector<8x128xf32>
    %c44 = arith.constant 44 : index
    %183 = memref.load %arg1[%c44] : memref<261xf32, #tpu.memory_space<smem>>
    %184 = vector.broadcast %183 : f32 to vector<8x128xf32>
    %185 = arith.mulf %63, %184 : vector<8x128xf32>
    %186 = arith.addf %182, %185 : vector<8x128xf32>
    %c45 = arith.constant 45 : index
    %187 = memref.load %arg1[%c45] : memref<261xf32, #tpu.memory_space<smem>>
    %188 = vector.broadcast %187 : f32 to vector<8x128xf32>
    %189 = arith.mulf %75, %188 : vector<8x128xf32>
    %190 = arith.addf %186, %189 : vector<8x128xf32>
    %c46 = arith.constant 46 : index
    %191 = memref.load %arg1[%c46] : memref<261xf32, #tpu.memory_space<smem>>
    %192 = vector.broadcast %191 : f32 to vector<8x128xf32>
    %193 = arith.mulf %87, %192 : vector<8x128xf32>
    %194 = arith.addf %190, %193 : vector<8x128xf32>
    %c47 = arith.constant 47 : index
    %195 = memref.load %arg1[%c47] : memref<261xf32, #tpu.memory_space<smem>>
    %196 = vector.broadcast %195 : f32 to vector<8x128xf32>
    %197 = arith.mulf %99, %196 : vector<8x128xf32>
    %198 = arith.addf %194, %197 : vector<8x128xf32>
    %c48 = arith.constant 48 : index
    %199 = memref.load %arg1[%c48] : memref<261xf32, #tpu.memory_space<smem>>
    %200 = vector.broadcast %199 : f32 to vector<8x128xf32>
    %201 = arith.mulf %111, %200 : vector<8x128xf32>
    %202 = arith.addf %198, %201 : vector<8x128xf32>
    %c49 = arith.constant 49 : index
    %203 = memref.load %arg1[%c49] : memref<261xf32, #tpu.memory_space<smem>>
    %204 = vector.broadcast %203 : f32 to vector<8x128xf32>
    %205 = arith.mulf %123, %204 : vector<8x128xf32>
    %206 = arith.addf %202, %205 : vector<8x128xf32>
    %c131 = arith.constant 131 : index
    %207 = memref.load %arg1[%c131] : memref<261xf32, #tpu.memory_space<smem>>
    %208 = vector.broadcast %207 : f32 to vector<8x128xf32>
    %209 = arith.addf %206, %208 : vector<8x128xf32>
    %cst_16 = arith.constant 0.000000e+00 : f32
    %210 = vector.broadcast %cst_16 : f32 to vector<8x128xf32>
    %211 = arith.maximumf %209, %210 : vector<8x128xf32>
    %c50 = arith.constant 50 : index
    %212 = memref.load %arg1[%c50] : memref<261xf32, #tpu.memory_space<smem>>
    %213 = vector.broadcast %212 : f32 to vector<8x128xf32>
    %214 = arith.mulf %15, %213 : vector<8x128xf32>
    %c51 = arith.constant 51 : index
    %215 = memref.load %arg1[%c51] : memref<261xf32, #tpu.memory_space<smem>>
    %216 = vector.broadcast %215 : f32 to vector<8x128xf32>
    %217 = arith.mulf %27, %216 : vector<8x128xf32>
    %218 = arith.addf %214, %217 : vector<8x128xf32>
    %c52 = arith.constant 52 : index
    %219 = memref.load %arg1[%c52] : memref<261xf32, #tpu.memory_space<smem>>
    %220 = vector.broadcast %219 : f32 to vector<8x128xf32>
    %221 = arith.mulf %39, %220 : vector<8x128xf32>
    %222 = arith.addf %218, %221 : vector<8x128xf32>
    %c53 = arith.constant 53 : index
    %223 = memref.load %arg1[%c53] : memref<261xf32, #tpu.memory_space<smem>>
    %224 = vector.broadcast %223 : f32 to vector<8x128xf32>
    %225 = arith.mulf %51, %224 : vector<8x128xf32>
    %226 = arith.addf %222, %225 : vector<8x128xf32>
    %c54 = arith.constant 54 : index
    %227 = memref.load %arg1[%c54] : memref<261xf32, #tpu.memory_space<smem>>
    %228 = vector.broadcast %227 : f32 to vector<8x128xf32>
    %229 = arith.mulf %63, %228 : vector<8x128xf32>
    %230 = arith.addf %226, %229 : vector<8x128xf32>
    %c55 = arith.constant 55 : index
    %231 = memref.load %arg1[%c55] : memref<261xf32, #tpu.memory_space<smem>>
    %232 = vector.broadcast %231 : f32 to vector<8x128xf32>
    %233 = arith.mulf %75, %232 : vector<8x128xf32>
    %234 = arith.addf %230, %233 : vector<8x128xf32>
    %c56 = arith.constant 56 : index
    %235 = memref.load %arg1[%c56] : memref<261xf32, #tpu.memory_space<smem>>
    %236 = vector.broadcast %235 : f32 to vector<8x128xf32>
    %237 = arith.mulf %87, %236 : vector<8x128xf32>
    %238 = arith.addf %234, %237 : vector<8x128xf32>
    %c57 = arith.constant 57 : index
    %239 = memref.load %arg1[%c57] : memref<261xf32, #tpu.memory_space<smem>>
    %240 = vector.broadcast %239 : f32 to vector<8x128xf32>
    %241 = arith.mulf %99, %240 : vector<8x128xf32>
    %242 = arith.addf %238, %241 : vector<8x128xf32>
    %c58 = arith.constant 58 : index
    %243 = memref.load %arg1[%c58] : memref<261xf32, #tpu.memory_space<smem>>
    %244 = vector.broadcast %243 : f32 to vector<8x128xf32>
    %245 = arith.mulf %111, %244 : vector<8x128xf32>
    %246 = arith.addf %242, %245 : vector<8x128xf32>
    %c59 = arith.constant 59 : index
    %247 = memref.load %arg1[%c59] : memref<261xf32, #tpu.memory_space<smem>>
    %248 = vector.broadcast %247 : f32 to vector<8x128xf32>
    %249 = arith.mulf %123, %248 : vector<8x128xf32>
    %250 = arith.addf %246, %249 : vector<8x128xf32>
    %c132 = arith.constant 132 : index
    %251 = memref.load %arg1[%c132] : memref<261xf32, #tpu.memory_space<smem>>
    %252 = vector.broadcast %251 : f32 to vector<8x128xf32>
    %253 = arith.addf %250, %252 : vector<8x128xf32>
    %cst_17 = arith.constant 0.000000e+00 : f32
    %254 = vector.broadcast %cst_17 : f32 to vector<8x128xf32>
    %255 = arith.maximumf %253, %254 : vector<8x128xf32>
    %c60 = arith.constant 60 : index
    %256 = memref.load %arg1[%c60] : memref<261xf32, #tpu.memory_space<smem>>
    %257 = vector.broadcast %256 : f32 to vector<8x128xf32>
    %258 = arith.mulf %15, %257 : vector<8x128xf32>
    %c61 = arith.constant 61 : index
    %259 = memref.load %arg1[%c61] : memref<261xf32, #tpu.memory_space<smem>>
    %260 = vector.broadcast %259 : f32 to vector<8x128xf32>
    %261 = arith.mulf %27, %260 : vector<8x128xf32>
    %262 = arith.addf %258, %261 : vector<8x128xf32>
    %c62 = arith.constant 62 : index
    %263 = memref.load %arg1[%c62] : memref<261xf32, #tpu.memory_space<smem>>
    %264 = vector.broadcast %263 : f32 to vector<8x128xf32>
    %265 = arith.mulf %39, %264 : vector<8x128xf32>
    %266 = arith.addf %262, %265 : vector<8x128xf32>
    %c63 = arith.constant 63 : index
    %267 = memref.load %arg1[%c63] : memref<261xf32, #tpu.memory_space<smem>>
    %268 = vector.broadcast %267 : f32 to vector<8x128xf32>
    %269 = arith.mulf %51, %268 : vector<8x128xf32>
    %270 = arith.addf %266, %269 : vector<8x128xf32>
    %c64 = arith.constant 64 : index
    %271 = memref.load %arg1[%c64] : memref<261xf32, #tpu.memory_space<smem>>
    %272 = vector.broadcast %271 : f32 to vector<8x128xf32>
    %273 = arith.mulf %63, %272 : vector<8x128xf32>
    %274 = arith.addf %270, %273 : vector<8x128xf32>
    %c65 = arith.constant 65 : index
    %275 = memref.load %arg1[%c65] : memref<261xf32, #tpu.memory_space<smem>>
    %276 = vector.broadcast %275 : f32 to vector<8x128xf32>
    %277 = arith.mulf %75, %276 : vector<8x128xf32>
    %278 = arith.addf %274, %277 : vector<8x128xf32>
    %c66 = arith.constant 66 : index
    %279 = memref.load %arg1[%c66] : memref<261xf32, #tpu.memory_space<smem>>
    %280 = vector.broadcast %279 : f32 to vector<8x128xf32>
    %281 = arith.mulf %87, %280 : vector<8x128xf32>
    %282 = arith.addf %278, %281 : vector<8x128xf32>
    %c67 = arith.constant 67 : index
    %283 = memref.load %arg1[%c67] : memref<261xf32, #tpu.memory_space<smem>>
    %284 = vector.broadcast %283 : f32 to vector<8x128xf32>
    %285 = arith.mulf %99, %284 : vector<8x128xf32>
    %286 = arith.addf %282, %285 : vector<8x128xf32>
    %c68 = arith.constant 68 : index
    %287 = memref.load %arg1[%c68] : memref<261xf32, #tpu.memory_space<smem>>
    %288 = vector.broadcast %287 : f32 to vector<8x128xf32>
    %289 = arith.mulf %111, %288 : vector<8x128xf32>
    %290 = arith.addf %286, %289 : vector<8x128xf32>
    %c69 = arith.constant 69 : index
    %291 = memref.load %arg1[%c69] : memref<261xf32, #tpu.memory_space<smem>>
    %292 = vector.broadcast %291 : f32 to vector<8x128xf32>
    %293 = arith.mulf %123, %292 : vector<8x128xf32>
    %294 = arith.addf %290, %293 : vector<8x128xf32>
    %c133 = arith.constant 133 : index
    %295 = memref.load %arg1[%c133] : memref<261xf32, #tpu.memory_space<smem>>
    %296 = vector.broadcast %295 : f32 to vector<8x128xf32>
    %297 = arith.addf %294, %296 : vector<8x128xf32>
    %cst_18 = arith.constant 0.000000e+00 : f32
    %298 = vector.broadcast %cst_18 : f32 to vector<8x128xf32>
    %299 = arith.maximumf %297, %298 : vector<8x128xf32>
    %c70 = arith.constant 70 : index
    %300 = memref.load %arg1[%c70] : memref<261xf32, #tpu.memory_space<smem>>
    %301 = vector.broadcast %300 : f32 to vector<8x128xf32>
    %302 = arith.mulf %15, %301 : vector<8x128xf32>
    %c71 = arith.constant 71 : index
    %303 = memref.load %arg1[%c71] : memref<261xf32, #tpu.memory_space<smem>>
    %304 = vector.broadcast %303 : f32 to vector<8x128xf32>
    %305 = arith.mulf %27, %304 : vector<8x128xf32>
    %306 = arith.addf %302, %305 : vector<8x128xf32>
    %c72 = arith.constant 72 : index
    %307 = memref.load %arg1[%c72] : memref<261xf32, #tpu.memory_space<smem>>
    %308 = vector.broadcast %307 : f32 to vector<8x128xf32>
    %309 = arith.mulf %39, %308 : vector<8x128xf32>
    %310 = arith.addf %306, %309 : vector<8x128xf32>
    %c73 = arith.constant 73 : index
    %311 = memref.load %arg1[%c73] : memref<261xf32, #tpu.memory_space<smem>>
    %312 = vector.broadcast %311 : f32 to vector<8x128xf32>
    %313 = arith.mulf %51, %312 : vector<8x128xf32>
    %314 = arith.addf %310, %313 : vector<8x128xf32>
    %c74 = arith.constant 74 : index
    %315 = memref.load %arg1[%c74] : memref<261xf32, #tpu.memory_space<smem>>
    %316 = vector.broadcast %315 : f32 to vector<8x128xf32>
    %317 = arith.mulf %63, %316 : vector<8x128xf32>
    %318 = arith.addf %314, %317 : vector<8x128xf32>
    %c75 = arith.constant 75 : index
    %319 = memref.load %arg1[%c75] : memref<261xf32, #tpu.memory_space<smem>>
    %320 = vector.broadcast %319 : f32 to vector<8x128xf32>
    %321 = arith.mulf %75, %320 : vector<8x128xf32>
    %322 = arith.addf %318, %321 : vector<8x128xf32>
    %c76 = arith.constant 76 : index
    %323 = memref.load %arg1[%c76] : memref<261xf32, #tpu.memory_space<smem>>
    %324 = vector.broadcast %323 : f32 to vector<8x128xf32>
    %325 = arith.mulf %87, %324 : vector<8x128xf32>
    %326 = arith.addf %322, %325 : vector<8x128xf32>
    %c77 = arith.constant 77 : index
    %327 = memref.load %arg1[%c77] : memref<261xf32, #tpu.memory_space<smem>>
    %328 = vector.broadcast %327 : f32 to vector<8x128xf32>
    %329 = arith.mulf %99, %328 : vector<8x128xf32>
    %330 = arith.addf %326, %329 : vector<8x128xf32>
    %c78 = arith.constant 78 : index
    %331 = memref.load %arg1[%c78] : memref<261xf32, #tpu.memory_space<smem>>
    %332 = vector.broadcast %331 : f32 to vector<8x128xf32>
    %333 = arith.mulf %111, %332 : vector<8x128xf32>
    %334 = arith.addf %330, %333 : vector<8x128xf32>
    %c79 = arith.constant 79 : index
    %335 = memref.load %arg1[%c79] : memref<261xf32, #tpu.memory_space<smem>>
    %336 = vector.broadcast %335 : f32 to vector<8x128xf32>
    %337 = arith.mulf %123, %336 : vector<8x128xf32>
    %338 = arith.addf %334, %337 : vector<8x128xf32>
    %c134 = arith.constant 134 : index
    %339 = memref.load %arg1[%c134] : memref<261xf32, #tpu.memory_space<smem>>
    %340 = vector.broadcast %339 : f32 to vector<8x128xf32>
    %341 = arith.addf %338, %340 : vector<8x128xf32>
    %cst_19 = arith.constant 0.000000e+00 : f32
    %342 = vector.broadcast %cst_19 : f32 to vector<8x128xf32>
    %343 = arith.maximumf %341, %342 : vector<8x128xf32>
    %c80 = arith.constant 80 : index
    %344 = memref.load %arg1[%c80] : memref<261xf32, #tpu.memory_space<smem>>
    %345 = vector.broadcast %344 : f32 to vector<8x128xf32>
    %346 = arith.mulf %15, %345 : vector<8x128xf32>
    %c81 = arith.constant 81 : index
    %347 = memref.load %arg1[%c81] : memref<261xf32, #tpu.memory_space<smem>>
    %348 = vector.broadcast %347 : f32 to vector<8x128xf32>
    %349 = arith.mulf %27, %348 : vector<8x128xf32>
    %350 = arith.addf %346, %349 : vector<8x128xf32>
    %c82 = arith.constant 82 : index
    %351 = memref.load %arg1[%c82] : memref<261xf32, #tpu.memory_space<smem>>
    %352 = vector.broadcast %351 : f32 to vector<8x128xf32>
    %353 = arith.mulf %39, %352 : vector<8x128xf32>
    %354 = arith.addf %350, %353 : vector<8x128xf32>
    %c83 = arith.constant 83 : index
    %355 = memref.load %arg1[%c83] : memref<261xf32, #tpu.memory_space<smem>>
    %356 = vector.broadcast %355 : f32 to vector<8x128xf32>
    %357 = arith.mulf %51, %356 : vector<8x128xf32>
    %358 = arith.addf %354, %357 : vector<8x128xf32>
    %c84 = arith.constant 84 : index
    %359 = memref.load %arg1[%c84] : memref<261xf32, #tpu.memory_space<smem>>
    %360 = vector.broadcast %359 : f32 to vector<8x128xf32>
    %361 = arith.mulf %63, %360 : vector<8x128xf32>
    %362 = arith.addf %358, %361 : vector<8x128xf32>
    %c85 = arith.constant 85 : index
    %363 = memref.load %arg1[%c85] : memref<261xf32, #tpu.memory_space<smem>>
    %364 = vector.broadcast %363 : f32 to vector<8x128xf32>
    %365 = arith.mulf %75, %364 : vector<8x128xf32>
    %366 = arith.addf %362, %365 : vector<8x128xf32>
    %c86 = arith.constant 86 : index
    %367 = memref.load %arg1[%c86] : memref<261xf32, #tpu.memory_space<smem>>
    %368 = vector.broadcast %367 : f32 to vector<8x128xf32>
    %369 = arith.mulf %87, %368 : vector<8x128xf32>
    %370 = arith.addf %366, %369 : vector<8x128xf32>
    %c87 = arith.constant 87 : index
    %371 = memref.load %arg1[%c87] : memref<261xf32, #tpu.memory_space<smem>>
    %372 = vector.broadcast %371 : f32 to vector<8x128xf32>
    %373 = arith.mulf %99, %372 : vector<8x128xf32>
    %374 = arith.addf %370, %373 : vector<8x128xf32>
    %c88 = arith.constant 88 : index
    %375 = memref.load %arg1[%c88] : memref<261xf32, #tpu.memory_space<smem>>
    %376 = vector.broadcast %375 : f32 to vector<8x128xf32>
    %377 = arith.mulf %111, %376 : vector<8x128xf32>
    %378 = arith.addf %374, %377 : vector<8x128xf32>
    %c89 = arith.constant 89 : index
    %379 = memref.load %arg1[%c89] : memref<261xf32, #tpu.memory_space<smem>>
    %380 = vector.broadcast %379 : f32 to vector<8x128xf32>
    %381 = arith.mulf %123, %380 : vector<8x128xf32>
    %382 = arith.addf %378, %381 : vector<8x128xf32>
    %c135 = arith.constant 135 : index
    %383 = memref.load %arg1[%c135] : memref<261xf32, #tpu.memory_space<smem>>
    %384 = vector.broadcast %383 : f32 to vector<8x128xf32>
    %385 = arith.addf %382, %384 : vector<8x128xf32>
    %cst_20 = arith.constant 0.000000e+00 : f32
    %386 = vector.broadcast %cst_20 : f32 to vector<8x128xf32>
    %387 = arith.maximumf %385, %386 : vector<8x128xf32>
    %c90 = arith.constant 90 : index
    %388 = memref.load %arg1[%c90] : memref<261xf32, #tpu.memory_space<smem>>
    %389 = vector.broadcast %388 : f32 to vector<8x128xf32>
    %390 = arith.mulf %15, %389 : vector<8x128xf32>
    %c91 = arith.constant 91 : index
    %391 = memref.load %arg1[%c91] : memref<261xf32, #tpu.memory_space<smem>>
    %392 = vector.broadcast %391 : f32 to vector<8x128xf32>
    %393 = arith.mulf %27, %392 : vector<8x128xf32>
    %394 = arith.addf %390, %393 : vector<8x128xf32>
    %c92 = arith.constant 92 : index
    %395 = memref.load %arg1[%c92] : memref<261xf32, #tpu.memory_space<smem>>
    %396 = vector.broadcast %395 : f32 to vector<8x128xf32>
    %397 = arith.mulf %39, %396 : vector<8x128xf32>
    %398 = arith.addf %394, %397 : vector<8x128xf32>
    %c93 = arith.constant 93 : index
    %399 = memref.load %arg1[%c93] : memref<261xf32, #tpu.memory_space<smem>>
    %400 = vector.broadcast %399 : f32 to vector<8x128xf32>
    %401 = arith.mulf %51, %400 : vector<8x128xf32>
    %402 = arith.addf %398, %401 : vector<8x128xf32>
    %c94 = arith.constant 94 : index
    %403 = memref.load %arg1[%c94] : memref<261xf32, #tpu.memory_space<smem>>
    %404 = vector.broadcast %403 : f32 to vector<8x128xf32>
    %405 = arith.mulf %63, %404 : vector<8x128xf32>
    %406 = arith.addf %402, %405 : vector<8x128xf32>
    %c95 = arith.constant 95 : index
    %407 = memref.load %arg1[%c95] : memref<261xf32, #tpu.memory_space<smem>>
    %408 = vector.broadcast %407 : f32 to vector<8x128xf32>
    %409 = arith.mulf %75, %408 : vector<8x128xf32>
    %410 = arith.addf %406, %409 : vector<8x128xf32>
    %c96 = arith.constant 96 : index
    %411 = memref.load %arg1[%c96] : memref<261xf32, #tpu.memory_space<smem>>
    %412 = vector.broadcast %411 : f32 to vector<8x128xf32>
    %413 = arith.mulf %87, %412 : vector<8x128xf32>
    %414 = arith.addf %410, %413 : vector<8x128xf32>
    %c97 = arith.constant 97 : index
    %415 = memref.load %arg1[%c97] : memref<261xf32, #tpu.memory_space<smem>>
    %416 = vector.broadcast %415 : f32 to vector<8x128xf32>
    %417 = arith.mulf %99, %416 : vector<8x128xf32>
    %418 = arith.addf %414, %417 : vector<8x128xf32>
    %c98 = arith.constant 98 : index
    %419 = memref.load %arg1[%c98] : memref<261xf32, #tpu.memory_space<smem>>
    %420 = vector.broadcast %419 : f32 to vector<8x128xf32>
    %421 = arith.mulf %111, %420 : vector<8x128xf32>
    %422 = arith.addf %418, %421 : vector<8x128xf32>
    %c99 = arith.constant 99 : index
    %423 = memref.load %arg1[%c99] : memref<261xf32, #tpu.memory_space<smem>>
    %424 = vector.broadcast %423 : f32 to vector<8x128xf32>
    %425 = arith.mulf %123, %424 : vector<8x128xf32>
    %426 = arith.addf %422, %425 : vector<8x128xf32>
    %c136 = arith.constant 136 : index
    %427 = memref.load %arg1[%c136] : memref<261xf32, #tpu.memory_space<smem>>
    %428 = vector.broadcast %427 : f32 to vector<8x128xf32>
    %429 = arith.addf %426, %428 : vector<8x128xf32>
    %cst_21 = arith.constant 0.000000e+00 : f32
    %430 = vector.broadcast %cst_21 : f32 to vector<8x128xf32>
    %431 = arith.maximumf %429, %430 : vector<8x128xf32>
    %c100 = arith.constant 100 : index
    %432 = memref.load %arg1[%c100] : memref<261xf32, #tpu.memory_space<smem>>
    %433 = vector.broadcast %432 : f32 to vector<8x128xf32>
    %434 = arith.mulf %15, %433 : vector<8x128xf32>
    %c101 = arith.constant 101 : index
    %435 = memref.load %arg1[%c101] : memref<261xf32, #tpu.memory_space<smem>>
    %436 = vector.broadcast %435 : f32 to vector<8x128xf32>
    %437 = arith.mulf %27, %436 : vector<8x128xf32>
    %438 = arith.addf %434, %437 : vector<8x128xf32>
    %c102 = arith.constant 102 : index
    %439 = memref.load %arg1[%c102] : memref<261xf32, #tpu.memory_space<smem>>
    %440 = vector.broadcast %439 : f32 to vector<8x128xf32>
    %441 = arith.mulf %39, %440 : vector<8x128xf32>
    %442 = arith.addf %438, %441 : vector<8x128xf32>
    %c103 = arith.constant 103 : index
    %443 = memref.load %arg1[%c103] : memref<261xf32, #tpu.memory_space<smem>>
    %444 = vector.broadcast %443 : f32 to vector<8x128xf32>
    %445 = arith.mulf %51, %444 : vector<8x128xf32>
    %446 = arith.addf %442, %445 : vector<8x128xf32>
    %c104 = arith.constant 104 : index
    %447 = memref.load %arg1[%c104] : memref<261xf32, #tpu.memory_space<smem>>
    %448 = vector.broadcast %447 : f32 to vector<8x128xf32>
    %449 = arith.mulf %63, %448 : vector<8x128xf32>
    %450 = arith.addf %446, %449 : vector<8x128xf32>
    %c105 = arith.constant 105 : index
    %451 = memref.load %arg1[%c105] : memref<261xf32, #tpu.memory_space<smem>>
    %452 = vector.broadcast %451 : f32 to vector<8x128xf32>
    %453 = arith.mulf %75, %452 : vector<8x128xf32>
    %454 = arith.addf %450, %453 : vector<8x128xf32>
    %c106 = arith.constant 106 : index
    %455 = memref.load %arg1[%c106] : memref<261xf32, #tpu.memory_space<smem>>
    %456 = vector.broadcast %455 : f32 to vector<8x128xf32>
    %457 = arith.mulf %87, %456 : vector<8x128xf32>
    %458 = arith.addf %454, %457 : vector<8x128xf32>
    %c107 = arith.constant 107 : index
    %459 = memref.load %arg1[%c107] : memref<261xf32, #tpu.memory_space<smem>>
    %460 = vector.broadcast %459 : f32 to vector<8x128xf32>
    %461 = arith.mulf %99, %460 : vector<8x128xf32>
    %462 = arith.addf %458, %461 : vector<8x128xf32>
    %c108 = arith.constant 108 : index
    %463 = memref.load %arg1[%c108] : memref<261xf32, #tpu.memory_space<smem>>
    %464 = vector.broadcast %463 : f32 to vector<8x128xf32>
    %465 = arith.mulf %111, %464 : vector<8x128xf32>
    %466 = arith.addf %462, %465 : vector<8x128xf32>
    %c109 = arith.constant 109 : index
    %467 = memref.load %arg1[%c109] : memref<261xf32, #tpu.memory_space<smem>>
    %468 = vector.broadcast %467 : f32 to vector<8x128xf32>
    %469 = arith.mulf %123, %468 : vector<8x128xf32>
    %470 = arith.addf %466, %469 : vector<8x128xf32>
    %c137 = arith.constant 137 : index
    %471 = memref.load %arg1[%c137] : memref<261xf32, #tpu.memory_space<smem>>
    %472 = vector.broadcast %471 : f32 to vector<8x128xf32>
    %473 = arith.addf %470, %472 : vector<8x128xf32>
    %cst_22 = arith.constant 0.000000e+00 : f32
    %474 = vector.broadcast %cst_22 : f32 to vector<8x128xf32>
    %475 = arith.maximumf %473, %474 : vector<8x128xf32>
    %c110 = arith.constant 110 : index
    %476 = memref.load %arg1[%c110] : memref<261xf32, #tpu.memory_space<smem>>
    %477 = vector.broadcast %476 : f32 to vector<8x128xf32>
    %478 = arith.mulf %15, %477 : vector<8x128xf32>
    %c111 = arith.constant 111 : index
    %479 = memref.load %arg1[%c111] : memref<261xf32, #tpu.memory_space<smem>>
    %480 = vector.broadcast %479 : f32 to vector<8x128xf32>
    %481 = arith.mulf %27, %480 : vector<8x128xf32>
    %482 = arith.addf %478, %481 : vector<8x128xf32>
    %c112 = arith.constant 112 : index
    %483 = memref.load %arg1[%c112] : memref<261xf32, #tpu.memory_space<smem>>
    %484 = vector.broadcast %483 : f32 to vector<8x128xf32>
    %485 = arith.mulf %39, %484 : vector<8x128xf32>
    %486 = arith.addf %482, %485 : vector<8x128xf32>
    %c113 = arith.constant 113 : index
    %487 = memref.load %arg1[%c113] : memref<261xf32, #tpu.memory_space<smem>>
    %488 = vector.broadcast %487 : f32 to vector<8x128xf32>
    %489 = arith.mulf %51, %488 : vector<8x128xf32>
    %490 = arith.addf %486, %489 : vector<8x128xf32>
    %c114 = arith.constant 114 : index
    %491 = memref.load %arg1[%c114] : memref<261xf32, #tpu.memory_space<smem>>
    %492 = vector.broadcast %491 : f32 to vector<8x128xf32>
    %493 = arith.mulf %63, %492 : vector<8x128xf32>
    %494 = arith.addf %490, %493 : vector<8x128xf32>
    %c115 = arith.constant 115 : index
    %495 = memref.load %arg1[%c115] : memref<261xf32, #tpu.memory_space<smem>>
    %496 = vector.broadcast %495 : f32 to vector<8x128xf32>
    %497 = arith.mulf %75, %496 : vector<8x128xf32>
    %498 = arith.addf %494, %497 : vector<8x128xf32>
    %c116 = arith.constant 116 : index
    %499 = memref.load %arg1[%c116] : memref<261xf32, #tpu.memory_space<smem>>
    %500 = vector.broadcast %499 : f32 to vector<8x128xf32>
    %501 = arith.mulf %87, %500 : vector<8x128xf32>
    %502 = arith.addf %498, %501 : vector<8x128xf32>
    %c117 = arith.constant 117 : index
    %503 = memref.load %arg1[%c117] : memref<261xf32, #tpu.memory_space<smem>>
    %504 = vector.broadcast %503 : f32 to vector<8x128xf32>
    %505 = arith.mulf %99, %504 : vector<8x128xf32>
    %506 = arith.addf %502, %505 : vector<8x128xf32>
    %c118 = arith.constant 118 : index
    %507 = memref.load %arg1[%c118] : memref<261xf32, #tpu.memory_space<smem>>
    %508 = vector.broadcast %507 : f32 to vector<8x128xf32>
    %509 = arith.mulf %111, %508 : vector<8x128xf32>
    %510 = arith.addf %506, %509 : vector<8x128xf32>
    %c119 = arith.constant 119 : index
    %511 = memref.load %arg1[%c119] : memref<261xf32, #tpu.memory_space<smem>>
    %512 = vector.broadcast %511 : f32 to vector<8x128xf32>
    %513 = arith.mulf %123, %512 : vector<8x128xf32>
    %514 = arith.addf %510, %513 : vector<8x128xf32>
    %c138 = arith.constant 138 : index
    %515 = memref.load %arg1[%c138] : memref<261xf32, #tpu.memory_space<smem>>
    %516 = vector.broadcast %515 : f32 to vector<8x128xf32>
    %517 = arith.addf %514, %516 : vector<8x128xf32>
    %cst_23 = arith.constant 0.000000e+00 : f32
    %518 = vector.broadcast %cst_23 : f32 to vector<8x128xf32>
    %519 = arith.maximumf %517, %518 : vector<8x128xf32>
    %c120 = arith.constant 120 : index
    %520 = memref.load %arg1[%c120] : memref<261xf32, #tpu.memory_space<smem>>
    %521 = vector.broadcast %520 : f32 to vector<8x128xf32>
    %522 = arith.mulf %15, %521 : vector<8x128xf32>
    %c121 = arith.constant 121 : index
    %523 = memref.load %arg1[%c121] : memref<261xf32, #tpu.memory_space<smem>>
    %524 = vector.broadcast %523 : f32 to vector<8x128xf32>
    %525 = arith.mulf %27, %524 : vector<8x128xf32>
    %526 = arith.addf %522, %525 : vector<8x128xf32>
    %c122 = arith.constant 122 : index
    %527 = memref.load %arg1[%c122] : memref<261xf32, #tpu.memory_space<smem>>
    %528 = vector.broadcast %527 : f32 to vector<8x128xf32>
    %529 = arith.mulf %39, %528 : vector<8x128xf32>
    %530 = arith.addf %526, %529 : vector<8x128xf32>
    %c123 = arith.constant 123 : index
    %531 = memref.load %arg1[%c123] : memref<261xf32, #tpu.memory_space<smem>>
    %532 = vector.broadcast %531 : f32 to vector<8x128xf32>
    %533 = arith.mulf %51, %532 : vector<8x128xf32>
    %534 = arith.addf %530, %533 : vector<8x128xf32>
    %c124 = arith.constant 124 : index
    %535 = memref.load %arg1[%c124] : memref<261xf32, #tpu.memory_space<smem>>
    %536 = vector.broadcast %535 : f32 to vector<8x128xf32>
    %537 = arith.mulf %63, %536 : vector<8x128xf32>
    %538 = arith.addf %534, %537 : vector<8x128xf32>
    %c125 = arith.constant 125 : index
    %539 = memref.load %arg1[%c125] : memref<261xf32, #tpu.memory_space<smem>>
    %540 = vector.broadcast %539 : f32 to vector<8x128xf32>
    %541 = arith.mulf %75, %540 : vector<8x128xf32>
    %542 = arith.addf %538, %541 : vector<8x128xf32>
    %c126 = arith.constant 126 : index
    %543 = memref.load %arg1[%c126] : memref<261xf32, #tpu.memory_space<smem>>
    %544 = vector.broadcast %543 : f32 to vector<8x128xf32>
    %545 = arith.mulf %87, %544 : vector<8x128xf32>
    %546 = arith.addf %542, %545 : vector<8x128xf32>
    %c127 = arith.constant 127 : index
    %547 = memref.load %arg1[%c127] : memref<261xf32, #tpu.memory_space<smem>>
    %548 = vector.broadcast %547 : f32 to vector<8x128xf32>
    %549 = arith.mulf %99, %548 : vector<8x128xf32>
    %550 = arith.addf %546, %549 : vector<8x128xf32>
    %c128 = arith.constant 128 : index
    %551 = memref.load %arg1[%c128] : memref<261xf32, #tpu.memory_space<smem>>
    %552 = vector.broadcast %551 : f32 to vector<8x128xf32>
    %553 = arith.mulf %111, %552 : vector<8x128xf32>
    %554 = arith.addf %550, %553 : vector<8x128xf32>
    %c129 = arith.constant 129 : index
    %555 = memref.load %arg1[%c129] : memref<261xf32, #tpu.memory_space<smem>>
    %556 = vector.broadcast %555 : f32 to vector<8x128xf32>
    %557 = arith.mulf %123, %556 : vector<8x128xf32>
    %558 = arith.addf %554, %557 : vector<8x128xf32>
    %c139 = arith.constant 139 : index
    %559 = memref.load %arg1[%c139] : memref<261xf32, #tpu.memory_space<smem>>
    %560 = vector.broadcast %559 : f32 to vector<8x128xf32>
    %561 = arith.addf %558, %560 : vector<8x128xf32>
    %cst_24 = arith.constant 0.000000e+00 : f32
    %562 = vector.broadcast %cst_24 : f32 to vector<8x128xf32>
    %563 = arith.maximumf %561, %562 : vector<8x128xf32>
    %c140 = arith.constant 140 : index
    %564 = memref.load %arg1[%c140] : memref<261xf32, #tpu.memory_space<smem>>
    %565 = vector.broadcast %564 : f32 to vector<8x128xf32>
    %566 = arith.mulf %167, %565 : vector<8x128xf32>
    %c141 = arith.constant 141 : index
    %567 = memref.load %arg1[%c141] : memref<261xf32, #tpu.memory_space<smem>>
    %568 = vector.broadcast %567 : f32 to vector<8x128xf32>
    %569 = arith.mulf %211, %568 : vector<8x128xf32>
    %570 = arith.addf %566, %569 : vector<8x128xf32>
    %c142 = arith.constant 142 : index
    %571 = memref.load %arg1[%c142] : memref<261xf32, #tpu.memory_space<smem>>
    %572 = vector.broadcast %571 : f32 to vector<8x128xf32>
    %573 = arith.mulf %255, %572 : vector<8x128xf32>
    %574 = arith.addf %570, %573 : vector<8x128xf32>
    %c143 = arith.constant 143 : index
    %575 = memref.load %arg1[%c143] : memref<261xf32, #tpu.memory_space<smem>>
    %576 = vector.broadcast %575 : f32 to vector<8x128xf32>
    %577 = arith.mulf %299, %576 : vector<8x128xf32>
    %578 = arith.addf %574, %577 : vector<8x128xf32>
    %c144 = arith.constant 144 : index
    %579 = memref.load %arg1[%c144] : memref<261xf32, #tpu.memory_space<smem>>
    %580 = vector.broadcast %579 : f32 to vector<8x128xf32>
    %581 = arith.mulf %343, %580 : vector<8x128xf32>
    %582 = arith.addf %578, %581 : vector<8x128xf32>
    %c145 = arith.constant 145 : index
    %583 = memref.load %arg1[%c145] : memref<261xf32, #tpu.memory_space<smem>>
    %584 = vector.broadcast %583 : f32 to vector<8x128xf32>
    %585 = arith.mulf %387, %584 : vector<8x128xf32>
    %586 = arith.addf %582, %585 : vector<8x128xf32>
    %c146 = arith.constant 146 : index
    %587 = memref.load %arg1[%c146] : memref<261xf32, #tpu.memory_space<smem>>
    %588 = vector.broadcast %587 : f32 to vector<8x128xf32>
    %589 = arith.mulf %431, %588 : vector<8x128xf32>
    %590 = arith.addf %586, %589 : vector<8x128xf32>
    %c147 = arith.constant 147 : index
    %591 = memref.load %arg1[%c147] : memref<261xf32, #tpu.memory_space<smem>>
    %592 = vector.broadcast %591 : f32 to vector<8x128xf32>
    %593 = arith.mulf %475, %592 : vector<8x128xf32>
    %594 = arith.addf %590, %593 : vector<8x128xf32>
    %c148 = arith.constant 148 : index
    %595 = memref.load %arg1[%c148] : memref<261xf32, #tpu.memory_space<smem>>
    %596 = vector.broadcast %595 : f32 to vector<8x128xf32>
    %597 = arith.mulf %519, %596 : vector<8x128xf32>
    %598 = arith.addf %594, %597 : vector<8x128xf32>
    %c149 = arith.constant 149 : index
    %599 = memref.load %arg1[%c149] : memref<261xf32, #tpu.memory_space<smem>>
    %600 = vector.broadcast %599 : f32 to vector<8x128xf32>
    %601 = arith.mulf %563, %600 : vector<8x128xf32>
    %602 = arith.addf %598, %601 : vector<8x128xf32>
    %c240 = arith.constant 240 : index
    %603 = memref.load %arg1[%c240] : memref<261xf32, #tpu.memory_space<smem>>
    %604 = vector.broadcast %603 : f32 to vector<8x128xf32>
    %605 = arith.addf %602, %604 : vector<8x128xf32>
    %cst_25 = arith.constant 0.000000e+00 : f32
    %606 = vector.broadcast %cst_25 : f32 to vector<8x128xf32>
    %607 = arith.maximumf %605, %606 : vector<8x128xf32>
    %c150 = arith.constant 150 : index
    %608 = memref.load %arg1[%c150] : memref<261xf32, #tpu.memory_space<smem>>
    %609 = vector.broadcast %608 : f32 to vector<8x128xf32>
    %610 = arith.mulf %167, %609 : vector<8x128xf32>
    %c151 = arith.constant 151 : index
    %611 = memref.load %arg1[%c151] : memref<261xf32, #tpu.memory_space<smem>>
    %612 = vector.broadcast %611 : f32 to vector<8x128xf32>
    %613 = arith.mulf %211, %612 : vector<8x128xf32>
    %614 = arith.addf %610, %613 : vector<8x128xf32>
    %c152 = arith.constant 152 : index
    %615 = memref.load %arg1[%c152] : memref<261xf32, #tpu.memory_space<smem>>
    %616 = vector.broadcast %615 : f32 to vector<8x128xf32>
    %617 = arith.mulf %255, %616 : vector<8x128xf32>
    %618 = arith.addf %614, %617 : vector<8x128xf32>
    %c153 = arith.constant 153 : index
    %619 = memref.load %arg1[%c153] : memref<261xf32, #tpu.memory_space<smem>>
    %620 = vector.broadcast %619 : f32 to vector<8x128xf32>
    %621 = arith.mulf %299, %620 : vector<8x128xf32>
    %622 = arith.addf %618, %621 : vector<8x128xf32>
    %c154 = arith.constant 154 : index
    %623 = memref.load %arg1[%c154] : memref<261xf32, #tpu.memory_space<smem>>
    %624 = vector.broadcast %623 : f32 to vector<8x128xf32>
    %625 = arith.mulf %343, %624 : vector<8x128xf32>
    %626 = arith.addf %622, %625 : vector<8x128xf32>
    %c155 = arith.constant 155 : index
    %627 = memref.load %arg1[%c155] : memref<261xf32, #tpu.memory_space<smem>>
    %628 = vector.broadcast %627 : f32 to vector<8x128xf32>
    %629 = arith.mulf %387, %628 : vector<8x128xf32>
    %630 = arith.addf %626, %629 : vector<8x128xf32>
    %c156 = arith.constant 156 : index
    %631 = memref.load %arg1[%c156] : memref<261xf32, #tpu.memory_space<smem>>
    %632 = vector.broadcast %631 : f32 to vector<8x128xf32>
    %633 = arith.mulf %431, %632 : vector<8x128xf32>
    %634 = arith.addf %630, %633 : vector<8x128xf32>
    %c157 = arith.constant 157 : index
    %635 = memref.load %arg1[%c157] : memref<261xf32, #tpu.memory_space<smem>>
    %636 = vector.broadcast %635 : f32 to vector<8x128xf32>
    %637 = arith.mulf %475, %636 : vector<8x128xf32>
    %638 = arith.addf %634, %637 : vector<8x128xf32>
    %c158 = arith.constant 158 : index
    %639 = memref.load %arg1[%c158] : memref<261xf32, #tpu.memory_space<smem>>
    %640 = vector.broadcast %639 : f32 to vector<8x128xf32>
    %641 = arith.mulf %519, %640 : vector<8x128xf32>
    %642 = arith.addf %638, %641 : vector<8x128xf32>
    %c159 = arith.constant 159 : index
    %643 = memref.load %arg1[%c159] : memref<261xf32, #tpu.memory_space<smem>>
    %644 = vector.broadcast %643 : f32 to vector<8x128xf32>
    %645 = arith.mulf %563, %644 : vector<8x128xf32>
    %646 = arith.addf %642, %645 : vector<8x128xf32>
    %c241 = arith.constant 241 : index
    %647 = memref.load %arg1[%c241] : memref<261xf32, #tpu.memory_space<smem>>
    %648 = vector.broadcast %647 : f32 to vector<8x128xf32>
    %649 = arith.addf %646, %648 : vector<8x128xf32>
    %cst_26 = arith.constant 0.000000e+00 : f32
    %650 = vector.broadcast %cst_26 : f32 to vector<8x128xf32>
    %651 = arith.maximumf %649, %650 : vector<8x128xf32>
    %c160 = arith.constant 160 : index
    %652 = memref.load %arg1[%c160] : memref<261xf32, #tpu.memory_space<smem>>
    %653 = vector.broadcast %652 : f32 to vector<8x128xf32>
    %654 = arith.mulf %167, %653 : vector<8x128xf32>
    %c161 = arith.constant 161 : index
    %655 = memref.load %arg1[%c161] : memref<261xf32, #tpu.memory_space<smem>>
    %656 = vector.broadcast %655 : f32 to vector<8x128xf32>
    %657 = arith.mulf %211, %656 : vector<8x128xf32>
    %658 = arith.addf %654, %657 : vector<8x128xf32>
    %c162 = arith.constant 162 : index
    %659 = memref.load %arg1[%c162] : memref<261xf32, #tpu.memory_space<smem>>
    %660 = vector.broadcast %659 : f32 to vector<8x128xf32>
    %661 = arith.mulf %255, %660 : vector<8x128xf32>
    %662 = arith.addf %658, %661 : vector<8x128xf32>
    %c163 = arith.constant 163 : index
    %663 = memref.load %arg1[%c163] : memref<261xf32, #tpu.memory_space<smem>>
    %664 = vector.broadcast %663 : f32 to vector<8x128xf32>
    %665 = arith.mulf %299, %664 : vector<8x128xf32>
    %666 = arith.addf %662, %665 : vector<8x128xf32>
    %c164 = arith.constant 164 : index
    %667 = memref.load %arg1[%c164] : memref<261xf32, #tpu.memory_space<smem>>
    %668 = vector.broadcast %667 : f32 to vector<8x128xf32>
    %669 = arith.mulf %343, %668 : vector<8x128xf32>
    %670 = arith.addf %666, %669 : vector<8x128xf32>
    %c165 = arith.constant 165 : index
    %671 = memref.load %arg1[%c165] : memref<261xf32, #tpu.memory_space<smem>>
    %672 = vector.broadcast %671 : f32 to vector<8x128xf32>
    %673 = arith.mulf %387, %672 : vector<8x128xf32>
    %674 = arith.addf %670, %673 : vector<8x128xf32>
    %c166 = arith.constant 166 : index
    %675 = memref.load %arg1[%c166] : memref<261xf32, #tpu.memory_space<smem>>
    %676 = vector.broadcast %675 : f32 to vector<8x128xf32>
    %677 = arith.mulf %431, %676 : vector<8x128xf32>
    %678 = arith.addf %674, %677 : vector<8x128xf32>
    %c167 = arith.constant 167 : index
    %679 = memref.load %arg1[%c167] : memref<261xf32, #tpu.memory_space<smem>>
    %680 = vector.broadcast %679 : f32 to vector<8x128xf32>
    %681 = arith.mulf %475, %680 : vector<8x128xf32>
    %682 = arith.addf %678, %681 : vector<8x128xf32>
    %c168 = arith.constant 168 : index
    %683 = memref.load %arg1[%c168] : memref<261xf32, #tpu.memory_space<smem>>
    %684 = vector.broadcast %683 : f32 to vector<8x128xf32>
    %685 = arith.mulf %519, %684 : vector<8x128xf32>
    %686 = arith.addf %682, %685 : vector<8x128xf32>
    %c169 = arith.constant 169 : index
    %687 = memref.load %arg1[%c169] : memref<261xf32, #tpu.memory_space<smem>>
    %688 = vector.broadcast %687 : f32 to vector<8x128xf32>
    %689 = arith.mulf %563, %688 : vector<8x128xf32>
    %690 = arith.addf %686, %689 : vector<8x128xf32>
    %c242 = arith.constant 242 : index
    %691 = memref.load %arg1[%c242] : memref<261xf32, #tpu.memory_space<smem>>
    %692 = vector.broadcast %691 : f32 to vector<8x128xf32>
    %693 = arith.addf %690, %692 : vector<8x128xf32>
    %cst_27 = arith.constant 0.000000e+00 : f32
    %694 = vector.broadcast %cst_27 : f32 to vector<8x128xf32>
    %695 = arith.maximumf %693, %694 : vector<8x128xf32>
    %c170 = arith.constant 170 : index
    %696 = memref.load %arg1[%c170] : memref<261xf32, #tpu.memory_space<smem>>
    %697 = vector.broadcast %696 : f32 to vector<8x128xf32>
    %698 = arith.mulf %167, %697 : vector<8x128xf32>
    %c171 = arith.constant 171 : index
    %699 = memref.load %arg1[%c171] : memref<261xf32, #tpu.memory_space<smem>>
    %700 = vector.broadcast %699 : f32 to vector<8x128xf32>
    %701 = arith.mulf %211, %700 : vector<8x128xf32>
    %702 = arith.addf %698, %701 : vector<8x128xf32>
    %c172 = arith.constant 172 : index
    %703 = memref.load %arg1[%c172] : memref<261xf32, #tpu.memory_space<smem>>
    %704 = vector.broadcast %703 : f32 to vector<8x128xf32>
    %705 = arith.mulf %255, %704 : vector<8x128xf32>
    %706 = arith.addf %702, %705 : vector<8x128xf32>
    %c173 = arith.constant 173 : index
    %707 = memref.load %arg1[%c173] : memref<261xf32, #tpu.memory_space<smem>>
    %708 = vector.broadcast %707 : f32 to vector<8x128xf32>
    %709 = arith.mulf %299, %708 : vector<8x128xf32>
    %710 = arith.addf %706, %709 : vector<8x128xf32>
    %c174 = arith.constant 174 : index
    %711 = memref.load %arg1[%c174] : memref<261xf32, #tpu.memory_space<smem>>
    %712 = vector.broadcast %711 : f32 to vector<8x128xf32>
    %713 = arith.mulf %343, %712 : vector<8x128xf32>
    %714 = arith.addf %710, %713 : vector<8x128xf32>
    %c175 = arith.constant 175 : index
    %715 = memref.load %arg1[%c175] : memref<261xf32, #tpu.memory_space<smem>>
    %716 = vector.broadcast %715 : f32 to vector<8x128xf32>
    %717 = arith.mulf %387, %716 : vector<8x128xf32>
    %718 = arith.addf %714, %717 : vector<8x128xf32>
    %c176 = arith.constant 176 : index
    %719 = memref.load %arg1[%c176] : memref<261xf32, #tpu.memory_space<smem>>
    %720 = vector.broadcast %719 : f32 to vector<8x128xf32>
    %721 = arith.mulf %431, %720 : vector<8x128xf32>
    %722 = arith.addf %718, %721 : vector<8x128xf32>
    %c177 = arith.constant 177 : index
    %723 = memref.load %arg1[%c177] : memref<261xf32, #tpu.memory_space<smem>>
    %724 = vector.broadcast %723 : f32 to vector<8x128xf32>
    %725 = arith.mulf %475, %724 : vector<8x128xf32>
    %726 = arith.addf %722, %725 : vector<8x128xf32>
    %c178 = arith.constant 178 : index
    %727 = memref.load %arg1[%c178] : memref<261xf32, #tpu.memory_space<smem>>
    %728 = vector.broadcast %727 : f32 to vector<8x128xf32>
    %729 = arith.mulf %519, %728 : vector<8x128xf32>
    %730 = arith.addf %726, %729 : vector<8x128xf32>
    %c179 = arith.constant 179 : index
    %731 = memref.load %arg1[%c179] : memref<261xf32, #tpu.memory_space<smem>>
    %732 = vector.broadcast %731 : f32 to vector<8x128xf32>
    %733 = arith.mulf %563, %732 : vector<8x128xf32>
    %734 = arith.addf %730, %733 : vector<8x128xf32>
    %c243 = arith.constant 243 : index
    %735 = memref.load %arg1[%c243] : memref<261xf32, #tpu.memory_space<smem>>
    %736 = vector.broadcast %735 : f32 to vector<8x128xf32>
    %737 = arith.addf %734, %736 : vector<8x128xf32>
    %cst_28 = arith.constant 0.000000e+00 : f32
    %738 = vector.broadcast %cst_28 : f32 to vector<8x128xf32>
    %739 = arith.maximumf %737, %738 : vector<8x128xf32>
    %c180 = arith.constant 180 : index
    %740 = memref.load %arg1[%c180] : memref<261xf32, #tpu.memory_space<smem>>
    %741 = vector.broadcast %740 : f32 to vector<8x128xf32>
    %742 = arith.mulf %167, %741 : vector<8x128xf32>
    %c181 = arith.constant 181 : index
    %743 = memref.load %arg1[%c181] : memref<261xf32, #tpu.memory_space<smem>>
    %744 = vector.broadcast %743 : f32 to vector<8x128xf32>
    %745 = arith.mulf %211, %744 : vector<8x128xf32>
    %746 = arith.addf %742, %745 : vector<8x128xf32>
    %c182 = arith.constant 182 : index
    %747 = memref.load %arg1[%c182] : memref<261xf32, #tpu.memory_space<smem>>
    %748 = vector.broadcast %747 : f32 to vector<8x128xf32>
    %749 = arith.mulf %255, %748 : vector<8x128xf32>
    %750 = arith.addf %746, %749 : vector<8x128xf32>
    %c183 = arith.constant 183 : index
    %751 = memref.load %arg1[%c183] : memref<261xf32, #tpu.memory_space<smem>>
    %752 = vector.broadcast %751 : f32 to vector<8x128xf32>
    %753 = arith.mulf %299, %752 : vector<8x128xf32>
    %754 = arith.addf %750, %753 : vector<8x128xf32>
    %c184 = arith.constant 184 : index
    %755 = memref.load %arg1[%c184] : memref<261xf32, #tpu.memory_space<smem>>
    %756 = vector.broadcast %755 : f32 to vector<8x128xf32>
    %757 = arith.mulf %343, %756 : vector<8x128xf32>
    %758 = arith.addf %754, %757 : vector<8x128xf32>
    %c185 = arith.constant 185 : index
    %759 = memref.load %arg1[%c185] : memref<261xf32, #tpu.memory_space<smem>>
    %760 = vector.broadcast %759 : f32 to vector<8x128xf32>
    %761 = arith.mulf %387, %760 : vector<8x128xf32>
    %762 = arith.addf %758, %761 : vector<8x128xf32>
    %c186 = arith.constant 186 : index
    %763 = memref.load %arg1[%c186] : memref<261xf32, #tpu.memory_space<smem>>
    %764 = vector.broadcast %763 : f32 to vector<8x128xf32>
    %765 = arith.mulf %431, %764 : vector<8x128xf32>
    %766 = arith.addf %762, %765 : vector<8x128xf32>
    %c187 = arith.constant 187 : index
    %767 = memref.load %arg1[%c187] : memref<261xf32, #tpu.memory_space<smem>>
    %768 = vector.broadcast %767 : f32 to vector<8x128xf32>
    %769 = arith.mulf %475, %768 : vector<8x128xf32>
    %770 = arith.addf %766, %769 : vector<8x128xf32>
    %c188 = arith.constant 188 : index
    %771 = memref.load %arg1[%c188] : memref<261xf32, #tpu.memory_space<smem>>
    %772 = vector.broadcast %771 : f32 to vector<8x128xf32>
    %773 = arith.mulf %519, %772 : vector<8x128xf32>
    %774 = arith.addf %770, %773 : vector<8x128xf32>
    %c189 = arith.constant 189 : index
    %775 = memref.load %arg1[%c189] : memref<261xf32, #tpu.memory_space<smem>>
    %776 = vector.broadcast %775 : f32 to vector<8x128xf32>
    %777 = arith.mulf %563, %776 : vector<8x128xf32>
    %778 = arith.addf %774, %777 : vector<8x128xf32>
    %c244 = arith.constant 244 : index
    %779 = memref.load %arg1[%c244] : memref<261xf32, #tpu.memory_space<smem>>
    %780 = vector.broadcast %779 : f32 to vector<8x128xf32>
    %781 = arith.addf %778, %780 : vector<8x128xf32>
    %cst_29 = arith.constant 0.000000e+00 : f32
    %782 = vector.broadcast %cst_29 : f32 to vector<8x128xf32>
    %783 = arith.maximumf %781, %782 : vector<8x128xf32>
    %c190 = arith.constant 190 : index
    %784 = memref.load %arg1[%c190] : memref<261xf32, #tpu.memory_space<smem>>
    %785 = vector.broadcast %784 : f32 to vector<8x128xf32>
    %786 = arith.mulf %167, %785 : vector<8x128xf32>
    %c191 = arith.constant 191 : index
    %787 = memref.load %arg1[%c191] : memref<261xf32, #tpu.memory_space<smem>>
    %788 = vector.broadcast %787 : f32 to vector<8x128xf32>
    %789 = arith.mulf %211, %788 : vector<8x128xf32>
    %790 = arith.addf %786, %789 : vector<8x128xf32>
    %c192 = arith.constant 192 : index
    %791 = memref.load %arg1[%c192] : memref<261xf32, #tpu.memory_space<smem>>
    %792 = vector.broadcast %791 : f32 to vector<8x128xf32>
    %793 = arith.mulf %255, %792 : vector<8x128xf32>
    %794 = arith.addf %790, %793 : vector<8x128xf32>
    %c193 = arith.constant 193 : index
    %795 = memref.load %arg1[%c193] : memref<261xf32, #tpu.memory_space<smem>>
    %796 = vector.broadcast %795 : f32 to vector<8x128xf32>
    %797 = arith.mulf %299, %796 : vector<8x128xf32>
    %798 = arith.addf %794, %797 : vector<8x128xf32>
    %c194 = arith.constant 194 : index
    %799 = memref.load %arg1[%c194] : memref<261xf32, #tpu.memory_space<smem>>
    %800 = vector.broadcast %799 : f32 to vector<8x128xf32>
    %801 = arith.mulf %343, %800 : vector<8x128xf32>
    %802 = arith.addf %798, %801 : vector<8x128xf32>
    %c195 = arith.constant 195 : index
    %803 = memref.load %arg1[%c195] : memref<261xf32, #tpu.memory_space<smem>>
    %804 = vector.broadcast %803 : f32 to vector<8x128xf32>
    %805 = arith.mulf %387, %804 : vector<8x128xf32>
    %806 = arith.addf %802, %805 : vector<8x128xf32>
    %c196 = arith.constant 196 : index
    %807 = memref.load %arg1[%c196] : memref<261xf32, #tpu.memory_space<smem>>
    %808 = vector.broadcast %807 : f32 to vector<8x128xf32>
    %809 = arith.mulf %431, %808 : vector<8x128xf32>
    %810 = arith.addf %806, %809 : vector<8x128xf32>
    %c197 = arith.constant 197 : index
    %811 = memref.load %arg1[%c197] : memref<261xf32, #tpu.memory_space<smem>>
    %812 = vector.broadcast %811 : f32 to vector<8x128xf32>
    %813 = arith.mulf %475, %812 : vector<8x128xf32>
    %814 = arith.addf %810, %813 : vector<8x128xf32>
    %c198 = arith.constant 198 : index
    %815 = memref.load %arg1[%c198] : memref<261xf32, #tpu.memory_space<smem>>
    %816 = vector.broadcast %815 : f32 to vector<8x128xf32>
    %817 = arith.mulf %519, %816 : vector<8x128xf32>
    %818 = arith.addf %814, %817 : vector<8x128xf32>
    %c199 = arith.constant 199 : index
    %819 = memref.load %arg1[%c199] : memref<261xf32, #tpu.memory_space<smem>>
    %820 = vector.broadcast %819 : f32 to vector<8x128xf32>
    %821 = arith.mulf %563, %820 : vector<8x128xf32>
    %822 = arith.addf %818, %821 : vector<8x128xf32>
    %c245 = arith.constant 245 : index
    %823 = memref.load %arg1[%c245] : memref<261xf32, #tpu.memory_space<smem>>
    %824 = vector.broadcast %823 : f32 to vector<8x128xf32>
    %825 = arith.addf %822, %824 : vector<8x128xf32>
    %cst_30 = arith.constant 0.000000e+00 : f32
    %826 = vector.broadcast %cst_30 : f32 to vector<8x128xf32>
    %827 = arith.maximumf %825, %826 : vector<8x128xf32>
    %c200 = arith.constant 200 : index
    %828 = memref.load %arg1[%c200] : memref<261xf32, #tpu.memory_space<smem>>
    %829 = vector.broadcast %828 : f32 to vector<8x128xf32>
    %830 = arith.mulf %167, %829 : vector<8x128xf32>
    %c201 = arith.constant 201 : index
    %831 = memref.load %arg1[%c201] : memref<261xf32, #tpu.memory_space<smem>>
    %832 = vector.broadcast %831 : f32 to vector<8x128xf32>
    %833 = arith.mulf %211, %832 : vector<8x128xf32>
    %834 = arith.addf %830, %833 : vector<8x128xf32>
    %c202 = arith.constant 202 : index
    %835 = memref.load %arg1[%c202] : memref<261xf32, #tpu.memory_space<smem>>
    %836 = vector.broadcast %835 : f32 to vector<8x128xf32>
    %837 = arith.mulf %255, %836 : vector<8x128xf32>
    %838 = arith.addf %834, %837 : vector<8x128xf32>
    %c203 = arith.constant 203 : index
    %839 = memref.load %arg1[%c203] : memref<261xf32, #tpu.memory_space<smem>>
    %840 = vector.broadcast %839 : f32 to vector<8x128xf32>
    %841 = arith.mulf %299, %840 : vector<8x128xf32>
    %842 = arith.addf %838, %841 : vector<8x128xf32>
    %c204 = arith.constant 204 : index
    %843 = memref.load %arg1[%c204] : memref<261xf32, #tpu.memory_space<smem>>
    %844 = vector.broadcast %843 : f32 to vector<8x128xf32>
    %845 = arith.mulf %343, %844 : vector<8x128xf32>
    %846 = arith.addf %842, %845 : vector<8x128xf32>
    %c205 = arith.constant 205 : index
    %847 = memref.load %arg1[%c205] : memref<261xf32, #tpu.memory_space<smem>>
    %848 = vector.broadcast %847 : f32 to vector<8x128xf32>
    %849 = arith.mulf %387, %848 : vector<8x128xf32>
    %850 = arith.addf %846, %849 : vector<8x128xf32>
    %c206 = arith.constant 206 : index
    %851 = memref.load %arg1[%c206] : memref<261xf32, #tpu.memory_space<smem>>
    %852 = vector.broadcast %851 : f32 to vector<8x128xf32>
    %853 = arith.mulf %431, %852 : vector<8x128xf32>
    %854 = arith.addf %850, %853 : vector<8x128xf32>
    %c207 = arith.constant 207 : index
    %855 = memref.load %arg1[%c207] : memref<261xf32, #tpu.memory_space<smem>>
    %856 = vector.broadcast %855 : f32 to vector<8x128xf32>
    %857 = arith.mulf %475, %856 : vector<8x128xf32>
    %858 = arith.addf %854, %857 : vector<8x128xf32>
    %c208 = arith.constant 208 : index
    %859 = memref.load %arg1[%c208] : memref<261xf32, #tpu.memory_space<smem>>
    %860 = vector.broadcast %859 : f32 to vector<8x128xf32>
    %861 = arith.mulf %519, %860 : vector<8x128xf32>
    %862 = arith.addf %858, %861 : vector<8x128xf32>
    %c209 = arith.constant 209 : index
    %863 = memref.load %arg1[%c209] : memref<261xf32, #tpu.memory_space<smem>>
    %864 = vector.broadcast %863 : f32 to vector<8x128xf32>
    %865 = arith.mulf %563, %864 : vector<8x128xf32>
    %866 = arith.addf %862, %865 : vector<8x128xf32>
    %c246 = arith.constant 246 : index
    %867 = memref.load %arg1[%c246] : memref<261xf32, #tpu.memory_space<smem>>
    %868 = vector.broadcast %867 : f32 to vector<8x128xf32>
    %869 = arith.addf %866, %868 : vector<8x128xf32>
    %cst_31 = arith.constant 0.000000e+00 : f32
    %870 = vector.broadcast %cst_31 : f32 to vector<8x128xf32>
    %871 = arith.maximumf %869, %870 : vector<8x128xf32>
    %c210 = arith.constant 210 : index
    %872 = memref.load %arg1[%c210] : memref<261xf32, #tpu.memory_space<smem>>
    %873 = vector.broadcast %872 : f32 to vector<8x128xf32>
    %874 = arith.mulf %167, %873 : vector<8x128xf32>
    %c211 = arith.constant 211 : index
    %875 = memref.load %arg1[%c211] : memref<261xf32, #tpu.memory_space<smem>>
    %876 = vector.broadcast %875 : f32 to vector<8x128xf32>
    %877 = arith.mulf %211, %876 : vector<8x128xf32>
    %878 = arith.addf %874, %877 : vector<8x128xf32>
    %c212 = arith.constant 212 : index
    %879 = memref.load %arg1[%c212] : memref<261xf32, #tpu.memory_space<smem>>
    %880 = vector.broadcast %879 : f32 to vector<8x128xf32>
    %881 = arith.mulf %255, %880 : vector<8x128xf32>
    %882 = arith.addf %878, %881 : vector<8x128xf32>
    %c213 = arith.constant 213 : index
    %883 = memref.load %arg1[%c213] : memref<261xf32, #tpu.memory_space<smem>>
    %884 = vector.broadcast %883 : f32 to vector<8x128xf32>
    %885 = arith.mulf %299, %884 : vector<8x128xf32>
    %886 = arith.addf %882, %885 : vector<8x128xf32>
    %c214 = arith.constant 214 : index
    %887 = memref.load %arg1[%c214] : memref<261xf32, #tpu.memory_space<smem>>
    %888 = vector.broadcast %887 : f32 to vector<8x128xf32>
    %889 = arith.mulf %343, %888 : vector<8x128xf32>
    %890 = arith.addf %886, %889 : vector<8x128xf32>
    %c215 = arith.constant 215 : index
    %891 = memref.load %arg1[%c215] : memref<261xf32, #tpu.memory_space<smem>>
    %892 = vector.broadcast %891 : f32 to vector<8x128xf32>
    %893 = arith.mulf %387, %892 : vector<8x128xf32>
    %894 = arith.addf %890, %893 : vector<8x128xf32>
    %c216 = arith.constant 216 : index
    %895 = memref.load %arg1[%c216] : memref<261xf32, #tpu.memory_space<smem>>
    %896 = vector.broadcast %895 : f32 to vector<8x128xf32>
    %897 = arith.mulf %431, %896 : vector<8x128xf32>
    %898 = arith.addf %894, %897 : vector<8x128xf32>
    %c217 = arith.constant 217 : index
    %899 = memref.load %arg1[%c217] : memref<261xf32, #tpu.memory_space<smem>>
    %900 = vector.broadcast %899 : f32 to vector<8x128xf32>
    %901 = arith.mulf %475, %900 : vector<8x128xf32>
    %902 = arith.addf %898, %901 : vector<8x128xf32>
    %c218 = arith.constant 218 : index
    %903 = memref.load %arg1[%c218] : memref<261xf32, #tpu.memory_space<smem>>
    %904 = vector.broadcast %903 : f32 to vector<8x128xf32>
    %905 = arith.mulf %519, %904 : vector<8x128xf32>
    %906 = arith.addf %902, %905 : vector<8x128xf32>
    %c219 = arith.constant 219 : index
    %907 = memref.load %arg1[%c219] : memref<261xf32, #tpu.memory_space<smem>>
    %908 = vector.broadcast %907 : f32 to vector<8x128xf32>
    %909 = arith.mulf %563, %908 : vector<8x128xf32>
    %910 = arith.addf %906, %909 : vector<8x128xf32>
    %c247 = arith.constant 247 : index
    %911 = memref.load %arg1[%c247] : memref<261xf32, #tpu.memory_space<smem>>
    %912 = vector.broadcast %911 : f32 to vector<8x128xf32>
    %913 = arith.addf %910, %912 : vector<8x128xf32>
    %cst_32 = arith.constant 0.000000e+00 : f32
    %914 = vector.broadcast %cst_32 : f32 to vector<8x128xf32>
    %915 = arith.maximumf %913, %914 : vector<8x128xf32>
    %c220 = arith.constant 220 : index
    %916 = memref.load %arg1[%c220] : memref<261xf32, #tpu.memory_space<smem>>
    %917 = vector.broadcast %916 : f32 to vector<8x128xf32>
    %918 = arith.mulf %167, %917 : vector<8x128xf32>
    %c221 = arith.constant 221 : index
    %919 = memref.load %arg1[%c221] : memref<261xf32, #tpu.memory_space<smem>>
    %920 = vector.broadcast %919 : f32 to vector<8x128xf32>
    %921 = arith.mulf %211, %920 : vector<8x128xf32>
    %922 = arith.addf %918, %921 : vector<8x128xf32>
    %c222 = arith.constant 222 : index
    %923 = memref.load %arg1[%c222] : memref<261xf32, #tpu.memory_space<smem>>
    %924 = vector.broadcast %923 : f32 to vector<8x128xf32>
    %925 = arith.mulf %255, %924 : vector<8x128xf32>
    %926 = arith.addf %922, %925 : vector<8x128xf32>
    %c223 = arith.constant 223 : index
    %927 = memref.load %arg1[%c223] : memref<261xf32, #tpu.memory_space<smem>>
    %928 = vector.broadcast %927 : f32 to vector<8x128xf32>
    %929 = arith.mulf %299, %928 : vector<8x128xf32>
    %930 = arith.addf %926, %929 : vector<8x128xf32>
    %c224 = arith.constant 224 : index
    %931 = memref.load %arg1[%c224] : memref<261xf32, #tpu.memory_space<smem>>
    %932 = vector.broadcast %931 : f32 to vector<8x128xf32>
    %933 = arith.mulf %343, %932 : vector<8x128xf32>
    %934 = arith.addf %930, %933 : vector<8x128xf32>
    %c225 = arith.constant 225 : index
    %935 = memref.load %arg1[%c225] : memref<261xf32, #tpu.memory_space<smem>>
    %936 = vector.broadcast %935 : f32 to vector<8x128xf32>
    %937 = arith.mulf %387, %936 : vector<8x128xf32>
    %938 = arith.addf %934, %937 : vector<8x128xf32>
    %c226 = arith.constant 226 : index
    %939 = memref.load %arg1[%c226] : memref<261xf32, #tpu.memory_space<smem>>
    %940 = vector.broadcast %939 : f32 to vector<8x128xf32>
    %941 = arith.mulf %431, %940 : vector<8x128xf32>
    %942 = arith.addf %938, %941 : vector<8x128xf32>
    %c227 = arith.constant 227 : index
    %943 = memref.load %arg1[%c227] : memref<261xf32, #tpu.memory_space<smem>>
    %944 = vector.broadcast %943 : f32 to vector<8x128xf32>
    %945 = arith.mulf %475, %944 : vector<8x128xf32>
    %946 = arith.addf %942, %945 : vector<8x128xf32>
    %c228 = arith.constant 228 : index
    %947 = memref.load %arg1[%c228] : memref<261xf32, #tpu.memory_space<smem>>
    %948 = vector.broadcast %947 : f32 to vector<8x128xf32>
    %949 = arith.mulf %519, %948 : vector<8x128xf32>
    %950 = arith.addf %946, %949 : vector<8x128xf32>
    %c229 = arith.constant 229 : index
    %951 = memref.load %arg1[%c229] : memref<261xf32, #tpu.memory_space<smem>>
    %952 = vector.broadcast %951 : f32 to vector<8x128xf32>
    %953 = arith.mulf %563, %952 : vector<8x128xf32>
    %954 = arith.addf %950, %953 : vector<8x128xf32>
    %c248 = arith.constant 248 : index
    %955 = memref.load %arg1[%c248] : memref<261xf32, #tpu.memory_space<smem>>
    %956 = vector.broadcast %955 : f32 to vector<8x128xf32>
    %957 = arith.addf %954, %956 : vector<8x128xf32>
    %cst_33 = arith.constant 0.000000e+00 : f32
    %958 = vector.broadcast %cst_33 : f32 to vector<8x128xf32>
    %959 = arith.maximumf %957, %958 : vector<8x128xf32>
    %c230 = arith.constant 230 : index
    %960 = memref.load %arg1[%c230] : memref<261xf32, #tpu.memory_space<smem>>
    %961 = vector.broadcast %960 : f32 to vector<8x128xf32>
    %962 = arith.mulf %167, %961 : vector<8x128xf32>
    %c231 = arith.constant 231 : index
    %963 = memref.load %arg1[%c231] : memref<261xf32, #tpu.memory_space<smem>>
    %964 = vector.broadcast %963 : f32 to vector<8x128xf32>
    %965 = arith.mulf %211, %964 : vector<8x128xf32>
    %966 = arith.addf %962, %965 : vector<8x128xf32>
    %c232 = arith.constant 232 : index
    %967 = memref.load %arg1[%c232] : memref<261xf32, #tpu.memory_space<smem>>
    %968 = vector.broadcast %967 : f32 to vector<8x128xf32>
    %969 = arith.mulf %255, %968 : vector<8x128xf32>
    %970 = arith.addf %966, %969 : vector<8x128xf32>
    %c233 = arith.constant 233 : index
    %971 = memref.load %arg1[%c233] : memref<261xf32, #tpu.memory_space<smem>>
    %972 = vector.broadcast %971 : f32 to vector<8x128xf32>
    %973 = arith.mulf %299, %972 : vector<8x128xf32>
    %974 = arith.addf %970, %973 : vector<8x128xf32>
    %c234 = arith.constant 234 : index
    %975 = memref.load %arg1[%c234] : memref<261xf32, #tpu.memory_space<smem>>
    %976 = vector.broadcast %975 : f32 to vector<8x128xf32>
    %977 = arith.mulf %343, %976 : vector<8x128xf32>
    %978 = arith.addf %974, %977 : vector<8x128xf32>
    %c235 = arith.constant 235 : index
    %979 = memref.load %arg1[%c235] : memref<261xf32, #tpu.memory_space<smem>>
    %980 = vector.broadcast %979 : f32 to vector<8x128xf32>
    %981 = arith.mulf %387, %980 : vector<8x128xf32>
    %982 = arith.addf %978, %981 : vector<8x128xf32>
    %c236 = arith.constant 236 : index
    %983 = memref.load %arg1[%c236] : memref<261xf32, #tpu.memory_space<smem>>
    %984 = vector.broadcast %983 : f32 to vector<8x128xf32>
    %985 = arith.mulf %431, %984 : vector<8x128xf32>
    %986 = arith.addf %982, %985 : vector<8x128xf32>
    %c237 = arith.constant 237 : index
    %987 = memref.load %arg1[%c237] : memref<261xf32, #tpu.memory_space<smem>>
    %988 = vector.broadcast %987 : f32 to vector<8x128xf32>
    %989 = arith.mulf %475, %988 : vector<8x128xf32>
    %990 = arith.addf %986, %989 : vector<8x128xf32>
    %c238 = arith.constant 238 : index
    %991 = memref.load %arg1[%c238] : memref<261xf32, #tpu.memory_space<smem>>
    %992 = vector.broadcast %991 : f32 to vector<8x128xf32>
    %993 = arith.mulf %519, %992 : vector<8x128xf32>
    %994 = arith.addf %990, %993 : vector<8x128xf32>
    %c239 = arith.constant 239 : index
    %995 = memref.load %arg1[%c239] : memref<261xf32, #tpu.memory_space<smem>>
    %996 = vector.broadcast %995 : f32 to vector<8x128xf32>
    %997 = arith.mulf %563, %996 : vector<8x128xf32>
    %998 = arith.addf %994, %997 : vector<8x128xf32>
    %c249 = arith.constant 249 : index
    %999 = memref.load %arg1[%c249] : memref<261xf32, #tpu.memory_space<smem>>
    %1000 = vector.broadcast %999 : f32 to vector<8x128xf32>
    %1001 = arith.addf %998, %1000 : vector<8x128xf32>
    %cst_34 = arith.constant 0.000000e+00 : f32
    %1002 = vector.broadcast %cst_34 : f32 to vector<8x128xf32>
    %1003 = arith.maximumf %1001, %1002 : vector<8x128xf32>
    %c250 = arith.constant 250 : index
    %1004 = memref.load %arg1[%c250] : memref<261xf32, #tpu.memory_space<smem>>
    %1005 = vector.broadcast %1004 : f32 to vector<8x128xf32>
    %1006 = arith.mulf %607, %1005 : vector<8x128xf32>
    %c251 = arith.constant 251 : index
    %1007 = memref.load %arg1[%c251] : memref<261xf32, #tpu.memory_space<smem>>
    %1008 = vector.broadcast %1007 : f32 to vector<8x128xf32>
    %1009 = arith.mulf %651, %1008 : vector<8x128xf32>
    %1010 = arith.addf %1006, %1009 : vector<8x128xf32>
    %c252 = arith.constant 252 : index
    %1011 = memref.load %arg1[%c252] : memref<261xf32, #tpu.memory_space<smem>>
    %1012 = vector.broadcast %1011 : f32 to vector<8x128xf32>
    %1013 = arith.mulf %695, %1012 : vector<8x128xf32>
    %1014 = arith.addf %1010, %1013 : vector<8x128xf32>
    %c253 = arith.constant 253 : index
    %1015 = memref.load %arg1[%c253] : memref<261xf32, #tpu.memory_space<smem>>
    %1016 = vector.broadcast %1015 : f32 to vector<8x128xf32>
    %1017 = arith.mulf %739, %1016 : vector<8x128xf32>
    %1018 = arith.addf %1014, %1017 : vector<8x128xf32>
    %c254 = arith.constant 254 : index
    %1019 = memref.load %arg1[%c254] : memref<261xf32, #tpu.memory_space<smem>>
    %1020 = vector.broadcast %1019 : f32 to vector<8x128xf32>
    %1021 = arith.mulf %783, %1020 : vector<8x128xf32>
    %1022 = arith.addf %1018, %1021 : vector<8x128xf32>
    %c255 = arith.constant 255 : index
    %1023 = memref.load %arg1[%c255] : memref<261xf32, #tpu.memory_space<smem>>
    %1024 = vector.broadcast %1023 : f32 to vector<8x128xf32>
    %1025 = arith.mulf %827, %1024 : vector<8x128xf32>
    %1026 = arith.addf %1022, %1025 : vector<8x128xf32>
    %c256 = arith.constant 256 : index
    %1027 = memref.load %arg1[%c256] : memref<261xf32, #tpu.memory_space<smem>>
    %1028 = vector.broadcast %1027 : f32 to vector<8x128xf32>
    %1029 = arith.mulf %871, %1028 : vector<8x128xf32>
    %1030 = arith.addf %1026, %1029 : vector<8x128xf32>
    %c257 = arith.constant 257 : index
    %1031 = memref.load %arg1[%c257] : memref<261xf32, #tpu.memory_space<smem>>
    %1032 = vector.broadcast %1031 : f32 to vector<8x128xf32>
    %1033 = arith.mulf %915, %1032 : vector<8x128xf32>
    %1034 = arith.addf %1030, %1033 : vector<8x128xf32>
    %c258 = arith.constant 258 : index
    %1035 = memref.load %arg1[%c258] : memref<261xf32, #tpu.memory_space<smem>>
    %1036 = vector.broadcast %1035 : f32 to vector<8x128xf32>
    %1037 = arith.mulf %959, %1036 : vector<8x128xf32>
    %1038 = arith.addf %1034, %1037 : vector<8x128xf32>
    %c259 = arith.constant 259 : index
    %1039 = memref.load %arg1[%c259] : memref<261xf32, #tpu.memory_space<smem>>
    %1040 = vector.broadcast %1039 : f32 to vector<8x128xf32>
    %1041 = arith.mulf %1003, %1040 : vector<8x128xf32>
    %1042 = arith.addf %1038, %1041 : vector<8x128xf32>
    %c260 = arith.constant 260 : index
    %1043 = memref.load %arg1[%c260] : memref<261xf32, #tpu.memory_space<smem>>
    %1044 = vector.broadcast %1043 : f32 to vector<8x128xf32>
    %1045 = arith.addf %1042, %1044 : vector<8x128xf32>
    %c0_35 = arith.constant 0 : index
    %c0_36 = arith.constant 0 : index
    %c0_37 = arith.constant 0 : index
    %1046 = vector.load %arg3[%c0_35, %c0_36, %c0_37] : memref<1x8x128xf32, #tpu.memory_space<vmem>>, vector<1x8x128xf32>
    %1047 = vector.shape_cast %1046 : vector<1x8x128xf32> to vector<8x128xf32>
    %1048 = vector.shape_cast %1045 : vector<8x128xf32> to vector<1x8x128xf32>
    tpu.vector_store %arg3[%c0_35, %c0_36, %c0_37], %1048 {strides = array<i32>} : memref<1x8x128xf32, #tpu.memory_space<vmem>>, vector<1x8x128xf32>,
    return
  }
  func.func @transform_0(%arg0: i32) -> i32 {
    %c0_i32 = arith.constant 0 : i32
    %c0_i32_0 = arith.constant 0 : i32
    return %c0_i32 : i32
  }
  func.func @transform_1(%arg0: i32) -> (i32, i32, i32) {
    %c0_i32 = arith.constant 0 : i32
    %c0_i32_0 = arith.constant 0 : i32
    %c0_i32_1 = arith.constant 0 : i32
    return %c0_i32, %arg0, %c0_i32_0 : i32, i32, i32
  }
  func.func @transform_2(%arg0: i32) -> (i32, i32, i32) {
    %c0_i32 = arith.constant 0 : i32
    %c0_i32_0 = arith.constant 0 : i32
    %c0_i32_1 = arith.constant 0 : i32
    return %c0_i32, %arg0, %c0_i32_0 : i32, i32, i32
  }
}

</mosaic_0001>

<llo_original>
// kernel: mlp_forward.1
$region0: #{mlp_forward.1}
  #allocation0 [shape = 'u32[]', space=smem, size = 0x4, offset = 0x4, fixed_abs, tag = 'smem constant byte address 0x4 - core index']
  #allocation1 [shape = 'u32[144,128]{1,0:T(1,128)}', space=vmem, size = 0x12000, scoped, tag = 'internal scratch']
  %s0 = inlined_call_operand.vmem [shape: f32[261], index: 0, kind: input, shape index: {}]
  %s1 = inlined_call_operand.vmem [shape: f32[2,8,128], index: 1, kind: input, shape index: {}]
  %s2 = inlined_call_operand.vmem [shape: f32[1,8,128], index: 2, kind: output, shape index: {}]
  %s3 = sld [smem:[#allocation0]]
  $region22: #{mlp_forward.1} parent=0
    _
  %s5 = ssub.s32 1, %s3
  %s6 = scalar_select 0, %s5, %s3
  $region1: #{mlp_forward.1} parent=0
    #allocation2 [shape = 'u8[1536]{0}', space=smem, size = 0x600, scoped, tag = 'input window, operand 0, single buffered']
    #allocation3 [shape = 's32[1]{0}', space=sflag, size = 0x4, scoped, tag = 'scoped memory for mlp_forward.1']
    %7 = vsyncpa [#allocation3], 0
    // Predicated region
    $region2: #{mlp_forward.1} parent=1 // pred_check
      _
    $region3: #{mlp_forward.1} parent=1 // pred_check_branch
      %9 = sbr.rel (0) target = $region5
    $region4: #{mlp_forward.1} parent=1 // pred_region
      %s11 = ssub.s32 48, 48
      %12 = vsyncadd [#allocation3], %s11
      %s14 = sshll.u32 %s0, 4
      %s15 = int_to_ptr.vmem [resolvable:$true] %s14
      %17 = dma.vmem_to_smem %s15, 48, [#allocation2], [#allocation3]
    $region5: #{mlp_forward.1} parent=1 // pred_fallthru
      _
    // Predicated region
    $region6: #{mlp_forward.1} parent=1 // pred_check
      _
    $region7: #{mlp_forward.1} parent=1 // pred_check_branch
      %19 = sbr.rel (0) target = $region9
    $region8: #{mlp_forward.1} parent=1 // pred_region
      _
    $region9: #{mlp_forward.1} parent=1 // pred_fallthru
      _
    // Predicated region
    $region10: #{mlp_forward.1} parent=1 // pred_check
      _
    $region11: #{mlp_forward.1} parent=1 // pred_check_branch
      %21 = sbr.rel (0) target = $region13
    $region12: #{mlp_forward.1} parent=1 // pred_region
      %22 = dma.done [#allocation3], 48
    $region13: #{mlp_forward.1} parent=1 // pred_fallthru
      _
    %23 = sfence
    %v24 = vld [vmem:[%s1] sm:$0xff]
    %s25 = scalar_lea.vmem %s1, 8
    %v26 = vld [vmem:[%s25] sm:$0xff]
    %s27 = sld [smem:[#allocation2]]
    %v28 = vstv %s27
    %v29 = vmul.f32 %v24, %v28
    %s30 = sld [smem:[#allocation2 + $0x1]]
    %v31 = vstv %s30
    %v32 = vmul.f32 %v26, %v31
    %v33 = vadd.f32 %v29, %v32
    %s34 = sld [smem:[#allocation2 + $0x14]]
    %v35 = vstv %s34
    %v36 = vadd.f32 %v33, %v35
    %v37 = vmax.f32 %v36, 0.0
    %s38 = sld [smem:[#allocation2 + $0x2]]
    %v39 = vstv %s38
    %v40 = vmul.f32 %v24, %v39
    %s41 = sld [smem:[#allocation2 + $0x3]]
    %v42 = vstv %s41
    %v43 = vmul.f32 %v26, %v42
    %v44 = vadd.f32 %v40, %v43
    %s45 = sld [smem:[#allocation2 + $0x15]]
    %v46 = vstv %s45
    %v47 = vadd.f32 %v44, %v46
    %v48 = vmax.f32 %v47, 0.0
    %s49 = sld [smem:[#allocation2 + $0x4]]
    %v50 = vstv %s49
    %v51 = vmul.f32 %v24, %v50
    %s52 = sld [smem:[#allocation2 + $0x5]]
    %v53 = vstv %s52
    %v54 = vmul.f32 %v26, %v53
    %v55 = vadd.f32 %v51, %v54
    %s56 = sld [smem:[#allocation2 + $0x16]]
    %v57 = vstv %s56
    %v58 = vadd.f32 %v55, %v57
    %v59 = vmax.f32 %v58, 0.0
    %s60 = sld [smem:[#allocation2 + $0x6]]
    %v61 = vstv %s60
    %v62 = vmul.f32 %v24, %v61
    %s63 = sld [smem:[#allocation2 + $0x7]]
    %v64 = vstv %s63
    %v65 = vmul.f32 %v26, %v64
    %v66 = vadd.f32 %v62, %v65
    %s67 = sld [smem:[#allocation2 + $0x17]]
    %v68 = vstv %s67
    %v69 = vadd.f32 %v66, %v68
    %v70 = vmax.f32 %v69, 0.0
    %s71 = sld [smem:[#allocation2 + $0x8]]
    %v72 = vstv %s71
    %v73 = vmul.f32 %v24, %v72
    %s74 = sld [smem:[#allocation2 + $0x9]]
    %v75 = vstv %s74
    %v76 = vmul.f32 %v26, %v75
    %v77 = vadd.f32 %v73, %v76
    %s78 = sld [smem:[#allocation2 + $0x18]]
    %v79 = vstv %s78
    %v80 = vadd.f32 %v77, %v79
    %v81 = vmax.f32 %v80, 0.0
    %s82 = sld [smem:[#allocation2 + $0xa]]
    %v83 = vstv %s82
    %v84 = vmul.f32 %v24, %v83
    %s85 = sld [smem:[#allocation2 + $0xb]]
    %v86 = vstv %s85
    %v87 = vmul.f32 %v26, %v86
    %v88 = vadd.f32 %v84, %v87
    %s89 = sld [smem:[#allocation2 + $0x19]]
    %v90 = vstv %s89
    %v91 = vadd.f32 %v88, %v90
    %v92 = vmax.f32 %v91, 0.0
    %s93 = sld [smem:[#allocation2 + $0xc]]
    %v94 = vstv %s93
    %v95 = vmul.f32 %v24, %v94
    %s96 = sld [smem:[#allocation2 + $0xd]]
    %v97 = vstv %s96
    %v98 = vmul.f32 %v26, %v97
    %v99 = vadd.f32 %v95, %v98
    %s100 = sld [smem:[#allocation2 + $0x1a]]
    %v101 = vstv %s100
    %v102 = vadd.f32 %v99, %v101
    %v103 = vmax.f32 %v102, 0.0
    %s104 = sld [smem:[#allocation2 + $0xe]]
    %v105 = vstv %s104
    %v106 = vmul.f32 %v24, %v105
    %s107 = sld [smem:[#allocation2 + $0xf]]
    %v108 = vstv %s107
    %v109 = vmul.f32 %v26, %v108
    %v110 = vadd.f32 %v106, %v109
    %s111 = sld [smem:[#allocation2 + $0x1b]]
    %v112 = vstv %s111
    %v113 = vadd.f32 %v110, %v112
    %v114 = vmax.f32 %v113, 0.0
    %s115 = sld [smem:[#allocation2 + $0x10]]
    %v116 = vstv %s115
    %v117 = vmul.f32 %v24, %v116
    %s118 = sld [smem:[#allocation2 + $0x11]]
    %v119 = vstv %s118
    %v120 = vmul.f32 %v26, %v119
    %v121 = vadd.f32 %v117, %v120
    %s122 = sld [smem:[#allocation2 + $0x1c]]
    %v123 = vstv %s122
    %v124 = vadd.f32 %v121, %v123
    %v125 = vmax.f32 %v124, 0.0
    %s126 = sld [smem:[#allocation2 + $0x12]]
    %v127 = vstv %s126
    %v128 = vmul.f32 %v24, %v127
    %s129 = sld [smem:[#allocation2 + $0x13]]
    %v130 = vstv %s129
    %v131 = vmul.f32 %v26, %v130
    %v132 = vadd.f32 %v128, %v131
    %s133 = sld [smem:[#allocation2 + $0x1d]]
    %v134 = vstv %s133
    %v135 = vadd.f32 %v132, %v134
    %v136 = vmax.f32 %v135, 0.0
    %s137 = sld [smem:[#allocation2 + $0x1e]]
    %v138 = vstv %s137
    %v139 = vmul.f32 %v37, %v138
    %s140 = sld [smem:[#allocation2 + $0x1f]]
    %v141 = vstv %s140
    %v142 = vmul.f32 %v48, %v141
    %v143 = vadd.f32 %v139, %v142
    %s144 = sld [smem:[#allocation2 + $0x20]]
    %v145 = vstv %s144
    %v146 = vmul.f32 %v59, %v145
    %v147 = vadd.f32 %v143, %v146
    %s148 = sld [smem:[#allocation2 + $0x21]]
    %v149 = vstv %s148
    %v150 = vmul.f32 %v70, %v149
    %v151 = vadd.f32 %v147, %v150
    %s152 = sld [smem:[#allocation2 + $0x22]]
    %v153 = vstv %s152
    %v154 = vmul.f32 %v81, %v153
    %v155 = vadd.f32 %v151, %v154
    %s156 = sld [smem:[#allocation2 + $0x23]]
    %v157 = vstv %s156
    %v158 = vmul.f32 %v92, %v157
    %v159 = vadd.f32 %v155, %v158
    %s160 = sld [smem:[#allocation2 + $0x24]]
    %v161 = vstv %s160
    %v162 = vmul.f32 %v103, %v161
    %v163 = vadd.f32 %v159, %v162
    %s164 = sld [smem:[#allocation2 + $0x25]]
    %v165 = vstv %s164
    %v166 = vmul.f32 %v114, %v165
    %v167 = vadd.f32 %v163, %v166
    %s168 = sld [smem:[#allocation2 + $0x26]]
    %v169 = vstv %s168
    %v170 = vmul.f32 %v125, %v169
    %v171 = vadd.f32 %v167, %v170
    %s172 = sld [smem:[#allocation2 + $0x27]]
    %v173 = vstv %s172
    %v174 = vmul.f32 %v136, %v173
    %v175 = vadd.f32 %v171, %v174
    %s176 = sld [smem:[#allocation2 + $0x82]]
    %v177 = vstv %s176
    %v178 = vadd.f32 %v175, %v177
    %v179 = vmax.f32 %v178, 0.0
    %s180 = sld [smem:[#allocation2 + $0x28]]
    %v181 = vstv %s180
    %v182 = vmul.f32 %v37, %v181
    %s183 = sld [smem:[#allocation2 + $0x29]]
    %v184 = vstv %s183
    %v185 = vmul.f32 %v48, %v184
    %v186 = vadd.f32 %v182, %v185
    %s187 = sld [smem:[#allocation2 + $0x2a]]
    %v188 = vstv %s187
    %v189 = vmul.f32 %v59, %v188
    %v190 = vadd.f32 %v186, %v189
    %s191 = sld [smem:[#allocation2 + $0x2b]]
    %v192 = vstv %s191
    %v193 = vmul.f32 %v70, %v192
    %v194 = vadd.f32 %v190, %v193
    %s195 = sld [smem:[#allocation2 + $0x2c]]
    %v196 = vstv %s195
    %v197 = vmul.f32 %v81, %v196
    %v198 = vadd.f32 %v194, %v197
    %s199 = sld [smem:[#allocation2 + $0x2d]]
    %v200 = vstv %s199
    %v201 = vmul.f32 %v92, %v200
    %v202 = vadd.f32 %v198, %v201
    %s203 = sld [smem:[#allocation2 + $0x2e]]
    %v204 = vstv %s203
    %v205 = vmul.f32 %v103, %v204
    %v206 = vadd.f32 %v202, %v205
    %s207 = sld [smem:[#allocation2 + $0x2f]]
    %v208 = vstv %s207
    %v209 = vmul.f32 %v114, %v208
    %v210 = vadd.f32 %v206, %v209
    %s211 = sld [smem:[#allocation2 + $0x30]]
    %v212 = vstv %s211
    %v213 = vmul.f32 %v125, %v212
    %v214 = vadd.f32 %v210, %v213
    %s215 = sld [smem:[#allocation2 + $0x31]]
    %v216 = vstv %s215
    %v217 = vmul.f32 %v136, %v216
    %v218 = vadd.f32 %v214, %v217
    %s219 = sld [smem:[#allocation2 + $0x83]]
    %v220 = vstv %s219
    %v221 = vadd.f32 %v218, %v220
    %v222 = vmax.f32 %v221, 0.0
    %s223 = sld [smem:[#allocation2 + $0x32]]
    %v224 = vstv %s223
    %v225 = vmul.f32 %v37, %v224
    %s226 = sld [smem:[#allocation2 + $0x33]]
    %v227 = vstv %s226
    %v228 = vmul.f32 %v48, %v227
    %v229 = vadd.f32 %v225, %v228
    %s230 = sld [smem:[#allocation2 + $0x34]]
    %v231 = vstv %s230
    %v232 = vmul.f32 %v59, %v231
    %v233 = vadd.f32 %v229, %v232
    %s234 = sld [smem:[#allocation2 + $0x35]]
    %v235 = vstv %s234
    %v236 = vmul.f32 %v70, %v235
    %v237 = vadd.f32 %v233, %v236
    %s238 = sld [smem:[#allocation2 + $0x36]]
    %v239 = vstv %s238
    %v240 = vmul.f32 %v81, %v239
    %v241 = vadd.f32 %v237, %v240
    %s242 = sld [smem:[#allocation2 + $0x37]]
    %v243 = vstv %s242
    %v244 = vmul.f32 %v92, %v243
    %v245 = vadd.f32 %v241, %v244
    %s246 = sld [smem:[#allocation2 + $0x38]]
    %v247 = vstv %s246
    %v248 = vmul.f32 %v103, %v247
    %v249 = vadd.f32 %v245, %v248
    %s250 = sld [smem:[#allocation2 + $0x39]]
    %v251 = vstv %s250
    %v252 = vmul.f32 %v114, %v251
    %v253 = vadd.f32 %v249, %v252
    %s254 = sld [smem:[#allocation2 + $0x3a]]
    %v255 = vstv %s254
    %v256 = vmul.f32 %v125, %v255
    %v257 = vadd.f32 %v253, %v256
    %s258 = sld [smem:[#allocation2 + $0x3b]]
    %v259 = vstv %s258
    %v260 = vmul.f32 %v136, %v259
    %v261 = vadd.f32 %v257, %v260
    %s262 = sld [smem:[#allocation2 + $0x84]]
    %v263 = vstv %s262
    %v264 = vadd.f32 %v261, %v263
    %v265 = vmax.f32 %v264, 0.0
    %s266 = sld [smem:[#allocation2 + $0x3c]]
    %v267 = vstv %s266
    %v268 = vmul.f32 %v37, %v267
    %s269 = sld [smem:[#allocation2 + $0x3d]]
    %v270 = vstv %s269
    %v271 = vmul.f32 %v48, %v270
    %v272 = vadd.f32 %v268, %v271
    %s273 = sld [smem:[#allocation2 + $0x3e]]
    %v274 = vstv %s273
    %v275 = vmul.f32 %v59, %v274
    %v276 = vadd.f32 %v272, %v275
    %s277 = sld [smem:[#allocation2 + $0x3f]]
    %v278 = vstv %s277
    %v279 = vmul.f32 %v70, %v278
    %v280 = vadd.f32 %v276, %v279
    %s281 = sld [smem:[#allocation2 + $0x40]]
    %v282 = vstv %s281
    %v283 = vmul.f32 %v81, %v282
    %v284 = vadd.f32 %v280, %v283
    %s285 = sld [smem:[#allocation2 + $0x41]]
    %v286 = vstv %s285
    %v287 = vmul.f32 %v92, %v286
    %v288 = vadd.f32 %v284, %v287
    %s289 = sld [smem:[#allocation2 + $0x42]]
    %v290 = vstv %s289
    %v291 = vmul.f32 %v103, %v290
    %v292 = vadd.f32 %v288, %v291
    %s293 = sld [smem:[#allocation2 + $0x43]]
    %v294 = vstv %s293
    %v295 = vmul.f32 %v114, %v294
    %v296 = vadd.f32 %v292, %v295
    %s297 = sld [smem:[#allocation2 + $0x44]]
    %v298 = vstv %s297
    %v299 = vmul.f32 %v125, %v298
    %v300 = vadd.f32 %v296, %v299
    %s301 = sld [smem:[#allocation2 + $0x45]]
    %v302 = vstv %s301
    %v303 = vmul.f32 %v136, %v302
    %v304 = vadd.f32 %v300, %v303
    %s305 = sld [smem:[#allocation2 + $0x85]]
    %v306 = vstv %s305
    %v307 = vadd.f32 %v304, %v306
    %v308 = vmax.f32 %v307, 0.0
    %s309 = sld [smem:[#allocation2 + $0x46]]
    %v310 = vstv %s309
    %v311 = vmul.f32 %v37, %v310
    %s312 = sld [smem:[#allocation2 + $0x47]]
    %v313 = vstv %s312
    %v314 = vmul.f32 %v48, %v313
    %v315 = vadd.f32 %v311, %v314
    %s316 = sld [smem:[#allocation2 + $0x48]]
    %v317 = vstv %s316
    %v318 = vmul.f32 %v59, %v317
    %v319 = vadd.f32 %v315, %v318
    %s320 = sld [smem:[#allocation2 + $0x49]]
    %v321 = vstv %s320
    %v322 = vmul.f32 %v70, %v321
    %v323 = vadd.f32 %v319, %v322
    %s324 = sld [smem:[#allocation2 + $0x4a]]
    %v325 = vstv %s324
    %v326 = vmul.f32 %v81, %v325
    %v327 = vadd.f32 %v323, %v326
    %s328 = sld [smem:[#allocation2 + $0x4b]]
    %v329 = vstv %s328
    %v330 = vmul.f32 %v92, %v329
    %v331 = vadd.f32 %v327, %v330
    %s332 = sld [smem:[#allocation2 + $0x4c]]
    %v333 = vstv %s332
    %v334 = vmul.f32 %v103, %v333
    %v335 = vadd.f32 %v331, %v334
    %s336 = sld [smem:[#allocation2 + $0x4d]]
    %v337 = vstv %s336
    %v338 = vmul.f32 %v114, %v337
    %v339 = vadd.f32 %v335, %v338
    %s340 = sld [smem:[#allocation2 + $0x4e]]
    %v341 = vstv %s340
    %v342 = vmul.f32 %v125, %v341
    %v343 = vadd.f32 %v339, %v342
    %s344 = sld [smem:[#allocation2 + $0x4f]]
    %v345 = vstv %s344
    %v346 = vmul.f32 %v136, %v345
    %v347 = vadd.f32 %v343, %v346
    %s348 = sld [smem:[#allocation2 + $0x86]]
    %v349 = vstv %s348
    %v350 = vadd.f32 %v347, %v349
    %v351 = vmax.f32 %v350, 0.0
    %s352 = sld [smem:[#allocation2 + $0x50]]
    %v353 = vstv %s352
    %v354 = vmul.f32 %v37, %v353
    %s355 = sld [smem:[#allocation2 + $0x51]]
    %v356 = vstv %s355
    %v357 = vmul.f32 %v48, %v356
    %v358 = vadd.f32 %v354, %v357
    %s359 = sld [smem:[#allocation2 + $0x52]]
    %v360 = vstv %s359
    %v361 = vmul.f32 %v59, %v360
    %v362 = vadd.f32 %v358, %v361
    %s363 = sld [smem:[#allocation2 + $0x53]]
    %v364 = vstv %s363
    %v365 = vmul.f32 %v70, %v364
    %v366 = vadd.f32 %v362, %v365
    %s367 = sld [smem:[#allocation2 + $0x54]]
    %v368 = vstv %s367
    %v369 = vmul.f32 %v81, %v368
    %v370 = vadd.f32 %v366, %v369
    %s371 = sld [smem:[#allocation2 + $0x55]]
    %v372 = vstv %s371
    %v373 = vmul.f32 %v92, %v372
    %v374 = vadd.f32 %v370, %v373
    %s375 = sld [smem:[#allocation2 + $0x56]]
    %v376 = vstv %s375
    %v377 = vmul.f32 %v103, %v376
    %v378 = vadd.f32 %v374, %v377
    %s379 = sld [smem:[#allocation2 + $0x57]]
    %v380 = vstv %s379
    %v381 = vmul.f32 %v114, %v380
    %v382 = vadd.f32 %v378, %v381
    %s383 = sld [smem:[#allocation2 + $0x58]]
    %v384 = vstv %s383
    %v385 = vmul.f32 %v125, %v384
    %v386 = vadd.f32 %v382, %v385
    %s387 = sld [smem:[#allocation2 + $0x59]]
    %v388 = vstv %s387
    %v389 = vmul.f32 %v136, %v388
    %v390 = vadd.f32 %v386, %v389
    %s391 = sld [smem:[#allocation2 + $0x87]]
    %v392 = vstv %s391
    %v393 = vadd.f32 %v390, %v392
    %v394 = vmax.f32 %v393, 0.0
    %s395 = sld [smem:[#allocation2 + $0x5a]]
    %v396 = vstv %s395
    %v397 = vmul.f32 %v37, %v396
    %s398 = sld [smem:[#allocation2 + $0x5b]]
    %v399 = vstv %s398
    %v400 = vmul.f32 %v48, %v399
    %v401 = vadd.f32 %v397, %v400
    %s402 = sld [smem:[#allocation2 + $0x5c]]
    %v403 = vstv %s402
    %v404 = vmul.f32 %v59, %v403
    %v405 = vadd.f32 %v401, %v404
    %s406 = sld [smem:[#allocation2 + $0x5d]]
    %v407 = vstv %s406
    %v408 = vmul.f32 %v70, %v407
    %v409 = vadd.f32 %v405, %v408
    %s410 = sld [smem:[#allocation2 + $0x5e]]
    %v411 = vstv %s410
    %v412 = vmul.f32 %v81, %v411
    %v413 = vadd.f32 %v409, %v412
    %s414 = sld [smem:[#allocation2 + $0x5f]]
    %v415 = vstv %s414
    %v416 = vmul.f32 %v92, %v415
    %v417 = vadd.f32 %v413, %v416
    %s418 = sld [smem:[#allocation2 + $0x60]]
    %v419 = vstv %s418
    %v420 = vmul.f32 %v103, %v419
    %v421 = vadd.f32 %v417, %v420
    %s422 = sld [smem:[#allocation2 + $0x61]]
    %v423 = vstv %s422
    %v424 = vmul.f32 %v114, %v423
    %v425 = vadd.f32 %v421, %v424
    %s426 = sld [smem:[#allocation2 + $0x62]]
    %v427 = vstv %s426
    %v428 = vmul.f32 %v125, %v427
    %v429 = vadd.f32 %v425, %v428
    %s430 = sld [smem:[#allocation2 + $0x63]]
    %v431 = vstv %s430
    %v432 = vmul.f32 %v136, %v431
    %v433 = vadd.f32 %v429, %v432
    %s434 = sld [smem:[#allocation2 + $0x88]]
    %v435 = vstv %s434
    %v436 = vadd.f32 %v433, %v435
    %v437 = vmax.f32 %v436, 0.0
    %s438 = sld [smem:[#allocation2 + $0x64]]
    %v439 = vstv %s438
    %v440 = vmul.f32 %v37, %v439
    %s441 = sld [smem:[#allocation2 + $0x65]]
    %v442 = vstv %s441
    %v443 = vmul.f32 %v48, %v442
    %v444 = vadd.f32 %v440, %v443
    %s445 = sld [smem:[#allocation2 + $0x66]]
    %v446 = vstv %s445
    %v447 = vmul.f32 %v59, %v446
    %v448 = vadd.f32 %v444, %v447
    %s449 = sld [smem:[#allocation2 + $0x67]]
    %v450 = vstv %s449
    %v451 = vmul.f32 %v70, %v450
    %v452 = vadd.f32 %v448, %v451
    %s453 = sld [smem:[#allocation2 + $0x68]]
    %v454 = vstv %s453
    %v455 = vmul.f32 %v81, %v454
    %v456 = vadd.f32 %v452, %v455
    %s457 = sld [smem:[#allocation2 + $0x69]]
    %v458 = vstv %s457
    %v459 = vmul.f32 %v92, %v458
    %v460 = vadd.f32 %v456, %v459
    %s461 = sld [smem:[#allocation2 + $0x6a]]
    %v462 = vstv %s461
    %v463 = vmul.f32 %v103, %v462
    %v464 = vadd.f32 %v460, %v463
    %s465 = sld [smem:[#allocation2 + $0x6b]]
    %v466 = vstv %s465
    %v467 = vmul.f32 %v114, %v466
    %v468 = vadd.f32 %v464, %v467
    %s469 = sld [smem:[#allocation2 + $0x6c]]
    %v470 = vstv %s469
    %v471 = vmul.f32 %v125, %v470
    %v472 = vadd.f32 %v468, %v471
    %s473 = sld [smem:[#allocation2 + $0x6d]]
    %v474 = vstv %s473
    %v475 = vmul.f32 %v136, %v474
    %v476 = vadd.f32 %v472, %v475
    %s477 = sld [smem:[#allocation2 + $0x89]]
    %v478 = vstv %s477
    %v479 = vadd.f32 %v476, %v478
    %v480 = vmax.f32 %v479, 0.0
    %s481 = sld [smem:[#allocation2 + $0x6e]]
    %v482 = vstv %s481
    %v483 = vmul.f32 %v37, %v482
    %s484 = sld [smem:[#allocation2 + $0x6f]]
    %v485 = vstv %s484
    %v486 = vmul.f32 %v48, %v485
    %v487 = vadd.f32 %v483, %v486
    %s488 = sld [smem:[#allocation2 + $0x70]]
    %v489 = vstv %s488
    %v490 = vmul.f32 %v59, %v489
    %v491 = vadd.f32 %v487, %v490
    %s492 = sld [smem:[#allocation2 + $0x71]]
    %v493 = vstv %s492
    %v494 = vmul.f32 %v70, %v493
    %v495 = vadd.f32 %v491, %v494
    %s496 = sld [smem:[#allocation2 + $0x72]]
    %v497 = vstv %s496
    %v498 = vmul.f32 %v81, %v497
    %v499 = vadd.f32 %v495, %v498
    %s500 = sld [smem:[#allocation2 + $0x73]]
    %v501 = vstv %s500
    %v502 = vmul.f32 %v92, %v501
    %v503 = vadd.f32 %v499, %v502
    %s504 = sld [smem:[#allocation2 + $0x74]]
    %v505 = vstv %s504
    %v506 = vmul.f32 %v103, %v505
    %v507 = vadd.f32 %v503, %v506
    %s508 = sld [smem:[#allocation2 + $0x75]]
    %v509 = vstv %s508
    %v510 = vmul.f32 %v114, %v509
    %v511 = vadd.f32 %v507, %v510
    %s512 = sld [smem:[#allocation2 + $0x76]]
    %v513 = vstv %s512
    %v514 = vmul.f32 %v125, %v513
    %v515 = vadd.f32 %v511, %v514
    %s516 = sld [smem:[#allocation2 + $0x77]]
    %v517 = vstv %s516
    %v518 = vmul.f32 %v136, %v517
    %v519 = vadd.f32 %v515, %v518
    %s520 = sld [smem:[#allocation2 + $0x8a]]
    %v521 = vstv %s520
    %v522 = vadd.f32 %v519, %v521
    %v523 = vmax.f32 %v522, 0.0
    %s524 = sld [smem:[#allocation2 + $0x78]]
    %v525 = vstv %s524
    %v526 = vmul.f32 %v37, %v525
    %s527 = sld [smem:[#allocation2 + $0x79]]
    %v528 = vstv %s527
    %v529 = vmul.f32 %v48, %v528
    %v530 = vadd.f32 %v526, %v529
    %s531 = sld [smem:[#allocation2 + $0x7a]]
    %v532 = vstv %s531
    %v533 = vmul.f32 %v59, %v532
    %v534 = vadd.f32 %v530, %v533
    %s535 = sld [smem:[#allocation2 + $0x7b]]
    %v536 = vstv %s535
    %v537 = vmul.f32 %v70, %v536
    %v538 = vadd.f32 %v534, %v537
    %s539 = sld [smem:[#allocation2 + $0x7c]]
    %v540 = vstv %s539
    %v541 = vmul.f32 %v81, %v540
    %v542 = vadd.f32 %v538, %v541
    %s543 = sld [smem:[#allocation2 + $0x7d]]
    %v544 = vstv %s543
    %v545 = vmul.f32 %v92, %v544
    %v546 = vadd.f32 %v542, %v545
    %s547 = sld [smem:[#allocation2 + $0x7e]]
    %v548 = vstv %s547
    %v549 = vmul.f32 %v103, %v548
    %v550 = vadd.f32 %v546, %v549
    %s551 = sld [smem:[#allocation2 + $0x7f]]
    %v552 = vstv %s551
    %v553 = vmul.f32 %v114, %v552
    %v554 = vadd.f32 %v550, %v553
    %s555 = sld [smem:[#allocation2 + $0x80]]
    %v556 = vstv %s555
    %v557 = vmul.f32 %v125, %v556
    %v558 = vadd.f32 %v554, %v557
    %s559 = sld [smem:[#allocation2 + $0x81]]
    %v560 = vstv %s559
    %v561 = vmul.f32 %v136, %v560
    %v562 = vadd.f32 %v558, %v561
    %s563 = sld [smem:[#allocation2 + $0x8b]]
    %v564 = vstv %s563
    %v565 = vadd.f32 %v562, %v564
    %v566 = vmax.f32 %v565, 0.0
    %s567 = sld [smem:[#allocation2 + $0x8c]]
    %v568 = vstv %s567
    %v569 = vmul.f32 %v179, %v568
    %s570 = sld [smem:[#allocation2 + $0x8d]]
    %v571 = vstv %s570
    %v572 = vmul.f32 %v222, %v571
    %v573 = vadd.f32 %v569, %v572
    %s574 = sld [smem:[#allocation2 + $0x8e]]
    %v575 = vstv %s574
    %v576 = vmul.f32 %v265, %v575
    %v577 = vadd.f32 %v573, %v576
    %s578 = sld [smem:[#allocation2 + $0x8f]]
    %v579 = vstv %s578
    %v580 = vmul.f32 %v308, %v579
    %v581 = vadd.f32 %v577, %v580
    %s582 = sld [smem:[#allocation2 + $0x90]]
    %v583 = vstv %s582
    %v584 = vmul.f32 %v351, %v583
    %v585 = vadd.f32 %v581, %v584
    %s586 = sld [smem:[#allocation2 + $0x91]]
    %v587 = vstv %s586
    %v588 = vmul.f32 %v394, %v587
    %v589 = vadd.f32 %v585, %v588
    %s590 = sld [smem:[#allocation2 + $0x92]]
    %v591 = vstv %s590
    %v592 = vmul.f32 %v437, %v591
    %v593 = vadd.f32 %v589, %v592
    %s594 = sld [smem:[#allocation2 + $0x93]]
    %v595 = vstv %s594
    %v596 = vmul.f32 %v480, %v595
    %v597 = vadd.f32 %v593, %v596
    %s598 = sld [smem:[#allocation2 + $0x94]]
    %v599 = vstv %s598
    %v600 = vmul.f32 %v523, %v599
    %v601 = vadd.f32 %v597, %v600
    %s602 = sld [smem:[#allocation2 + $0x95]]
    %v603 = vstv %s602
    %v604 = vmul.f32 %v566, %v603
    %v605 = vadd.f32 %v601, %v604
    %s606 = sld [smem:[#allocation2 + $0xf0]]
    %v607 = vstv %s606
    %v608 = vadd.f32 %v605, %v607
    %v609 = vmax.f32 %v608, 0.0
    %s610 = sld [smem:[#allocation2 + $0x96]]
    %v611 = vstv %s610
    %v612 = vmul.f32 %v179, %v611
    %s613 = sld [smem:[#allocation2 + $0x97]]
    %v614 = vstv %s613
    %v615 = vmul.f32 %v222, %v614
    %v616 = vadd.f32 %v612, %v615
    %s617 = sld [smem:[#allocation2 + $0x98]]
    %v618 = vstv %s617
    %v619 = vmul.f32 %v265, %v618
    %v620 = vadd.f32 %v616, %v619
    %s621 = sld [smem:[#allocation2 + $0x99]]
    %v622 = vstv %s621
    %v623 = vmul.f32 %v308, %v622
    %v624 = vadd.f32 %v620, %v623
    %s625 = sld [smem:[#allocation2 + $0x9a]]
    %v626 = vstv %s625
    %v627 = vmul.f32 %v351, %v626
    %v628 = vadd.f32 %v624, %v627
    %s629 = sld [smem:[#allocation2 + $0x9b]]
    %v630 = vstv %s629
    %v631 = vmul.f32 %v394, %v630
    %v632 = vadd.f32 %v628, %v631
    %s633 = sld [smem:[#allocation2 + $0x9c]]
    %v634 = vstv %s633
    %v635 = vmul.f32 %v437, %v634
    %v636 = vadd.f32 %v632, %v635
    %s637 = sld [smem:[#allocation2 + $0x9d]]
    %v638 = vstv %s637
    %v639 = vmul.f32 %v480, %v638
    %v640 = vadd.f32 %v636, %v639
    %s641 = sld [smem:[#allocation2 + $0x9e]]
    %v642 = vstv %s641
    %v643 = vmul.f32 %v523, %v642
    %v644 = vadd.f32 %v640, %v643
    %s645 = sld [smem:[#allocation2 + $0x9f]]
    %v646 = vstv %s645
    %v647 = vmul.f32 %v566, %v646
    %v648 = vadd.f32 %v644, %v647
    %s649 = sld [smem:[#allocation2 + $0xf1]]
    %v650 = vstv %s649
    %v651 = vadd.f32 %v648, %v650
    %v652 = vmax.f32 %v651, 0.0
    %s653 = sld [smem:[#allocation2 + $0xa0]]
    %v654 = vstv %s653
    %v655 = vmul.f32 %v179, %v654
    %s656 = sld [smem:[#allocation2 + $0xa1]]
    %v657 = vstv %s656
    %v658 = vmul.f32 %v222, %v657
    %v659 = vadd.f32 %v655, %v658
    %s660 = sld [smem:[#allocation2 + $0xa2]]
    %v661 = vstv %s660
    %v662 = vmul.f32 %v265, %v661
    %v663 = vadd.f32 %v659, %v662
    %s664 = sld [smem:[#allocation2 + $0xa3]]
    %v665 = vstv %s664
    %v666 = vmul.f32 %v308, %v665
    %v667 = vadd.f32 %v663, %v666
    %s668 = sld [smem:[#allocation2 + $0xa4]]
    %v669 = vstv %s668
    %v670 = vmul.f32 %v351, %v669
    %v671 = vadd.f32 %v667, %v670
    %s672 = sld [smem:[#allocation2 + $0xa5]]
    %v673 = vstv %s672
    %v674 = vmul.f32 %v394, %v673
    %v675 = vadd.f32 %v671, %v674
    %s676 = sld [smem:[#allocation2 + $0xa6]]
    %v677 = vstv %s676
    %v678 = vmul.f32 %v437, %v677
    %v679 = vadd.f32 %v675, %v678
    %s680 = sld [smem:[#allocation2 + $0xa7]]
    %v681 = vstv %s680
    %v682 = vmul.f32 %v480, %v681
    %v683 = vadd.f32 %v679, %v682
    %s684 = sld [smem:[#allocation2 + $0xa8]]
    %v685 = vstv %s684
    %v686 = vmul.f32 %v523, %v685
    %v687 = vadd.f32 %v683, %v686
    %s688 = sld [smem:[#allocation2 + $0xa9]]
    %v689 = vstv %s688
    %v690 = vmul.f32 %v566, %v689
    %v691 = vadd.f32 %v687, %v690
    %s692 = sld [smem:[#allocation2 + $0xf2]]
    %v693 = vstv %s692
    %v694 = vadd.f32 %v691, %v693
    %v695 = vmax.f32 %v694, 0.0
    %s696 = sld [smem:[#allocation2 + $0xaa]]
    %v697 = vstv %s696
    %v698 = vmul.f32 %v179, %v697
    %s699 = sld [smem:[#allocation2 + $0xab]]
    %v700 = vstv %s699
    %v701 = vmul.f32 %v222, %v700
    %v702 = vadd.f32 %v698, %v701
    %s703 = sld [smem:[#allocation2 + $0xac]]
    %v704 = vstv %s703
    %v705 = vmul.f32 %v265, %v704
    %v706 = vadd.f32 %v702, %v705
    %s707 = sld [smem:[#allocation2 + $0xad]]
    %v708 = vstv %s707
    %v709 = vmul.f32 %v308, %v708
    %v710 = vadd.f32 %v706, %v709
    %s711 = sld [smem:[#allocation2 + $0xae]]
    %v712 = vstv %s711
    %v713 = vmul.f32 %v351, %v712
    %v714 = vadd.f32 %v710, %v713
    %s715 = sld [smem:[#allocation2 + $0xaf]]
    %v716 = vstv %s715
    %v717 = vmul.f32 %v394, %v716
    %v718 = vadd.f32 %v714, %v717
    %s719 = sld [smem:[#allocation2 + $0xb0]]
    %v720 = vstv %s719
    %v721 = vmul.f32 %v437, %v720
    %v722 = vadd.f32 %v718, %v721
    %s723 = sld [smem:[#allocation2 + $0xb1]]
    %v724 = vstv %s723
    %v725 = vmul.f32 %v480, %v724
    %v726 = vadd.f32 %v722, %v725
    %s727 = sld [smem:[#allocation2 + $0xb2]]
    %v728 = vstv %s727
    %v729 = vmul.f32 %v523, %v728
    %v730 = vadd.f32 %v726, %v729
    %s731 = sld [smem:[#allocation2 + $0xb3]]
    %v732 = vstv %s731
    %v733 = vmul.f32 %v566, %v732
    %v734 = vadd.f32 %v730, %v733
    %s735 = sld [smem:[#allocation2 + $0xf3]]
    %v736 = vstv %s735
    %v737 = vadd.f32 %v734, %v736
    %v738 = vmax.f32 %v737, 0.0
    %s739 = sld [smem:[#allocation2 + $0xb4]]
    %v740 = vstv %s739
    %v741 = vmul.f32 %v179, %v740
    %s742 = sld [smem:[#allocation2 + $0xb5]]
    %v743 = vstv %s742
    %v744 = vmul.f32 %v222, %v743
    %v745 = vadd.f32 %v741, %v744
    %s746 = sld [smem:[#allocation2 + $0xb6]]
    %v747 = vstv %s746
    %v748 = vmul.f32 %v265, %v747
    %v749 = vadd.f32 %v745, %v748
    %s750 = sld [smem:[#allocation2 + $0xb7]]
    %v751 = vstv %s750
    %v752 = vmul.f32 %v308, %v751
    %v753 = vadd.f32 %v749, %v752
    %s754 = sld [smem:[#allocation2 + $0xb8]]
    %v755 = vstv %s754
    %v756 = vmul.f32 %v351, %v755
    %v757 = vadd.f32 %v753, %v756
    %s758 = sld [smem:[#allocation2 + $0xb9]]
    %v759 = vstv %s758
    %v760 = vmul.f32 %v394, %v759
    %v761 = vadd.f32 %v757, %v760
    %s762 = sld [smem:[#allocation2 + $0xba]]
    %v763 = vstv %s762
    %v764 = vmul.f32 %v437, %v763
    %v765 = vadd.f32 %v761, %v764
    %s766 = sld [smem:[#allocation2 + $0xbb]]
    %v767 = vstv %s766
    %v768 = vmul.f32 %v480, %v767
    %v769 = vadd.f32 %v765, %v768
    %s770 = sld [smem:[#allocation2 + $0xbc]]
    %v771 = vstv %s770
    %v772 = vmul.f32 %v523, %v771
    %v773 = vadd.f32 %v769, %v772
    %s774 = sld [smem:[#allocation2 + $0xbd]]
    %v775 = vstv %s774
    %v776 = vmul.f32 %v566, %v775
    %v777 = vadd.f32 %v773, %v776
    %s778 = sld [smem:[#allocation2 + $0xf4]]
    %v779 = vstv %s778
    %v780 = vadd.f32 %v777, %v779
    %v781 = vmax.f32 %v780, 0.0
    %s782 = sld [smem:[#allocation2 + $0xbe]]
    %v783 = vstv %s782
    %v784 = vmul.f32 %v179, %v783
    %s785 = sld [smem:[#allocation2 + $0xbf]]
    %v786 = vstv %s785
    %v787 = vmul.f32 %v222, %v786
    %v788 = vadd.f32 %v784, %v787
    %s789 = sld [smem:[#allocation2 + $0xc0]]
    %v790 = vstv %s789
    %v791 = vmul.f32 %v265, %v790
    %v792 = vadd.f32 %v788, %v791
    %s793 = sld [smem:[#allocation2 + $0xc1]]
    %v794 = vstv %s793
    %v795 = vmul.f32 %v308, %v794
    %v796 = vadd.f32 %v792, %v795
    %s797 = sld [smem:[#allocation2 + $0xc2]]
    %v798 = vstv %s797
    %v799 = vmul.f32 %v351, %v798
    %v800 = vadd.f32 %v796, %v799
    %s801 = sld [smem:[#allocation2 + $0xc3]]
    %v802 = vstv %s801
    %v803 = vmul.f32 %v394, %v802
    %v804 = vadd.f32 %v800, %v803
    %s805 = sld [smem:[#allocation2 + $0xc4]]
    %v806 = vstv %s805
    %v807 = vmul.f32 %v437, %v806
    %v808 = vadd.f32 %v804, %v807
    %s809 = sld [smem:[#allocation2 + $0xc5]]
    %v810 = vstv %s809
    %v811 = vmul.f32 %v480, %v810
    %v812 = vadd.f32 %v808, %v811
    %s813 = sld [smem:[#allocation2 + $0xc6]]
    %v814 = vstv %s813
    %v815 = vmul.f32 %v523, %v814
    %v816 = vadd.f32 %v812, %v815
    %s817 = sld [smem:[#allocation2 + $0xc7]]
    %v818 = vstv %s817
    %v819 = vmul.f32 %v566, %v818
    %v820 = vadd.f32 %v816, %v819
    %s821 = sld [smem:[#allocation2 + $0xf5]]
    %v822 = vstv %s821
    %v823 = vadd.f32 %v820, %v822
    %v824 = vmax.f32 %v823, 0.0
    %s825 = sld [smem:[#allocation2 + $0xc8]]
    %v826 = vstv %s825
    %v827 = vmul.f32 %v179, %v826
    %s828 = sld [smem:[#allocation2 + $0xc9]]
    %v829 = vstv %s828
    %v830 = vmul.f32 %v222, %v829
    %v831 = vadd.f32 %v827, %v830
    %s832 = sld [smem:[#allocation2 + $0xca]]
    %v833 = vstv %s832
    %v834 = vmul.f32 %v265, %v833
    %v835 = vadd.f32 %v831, %v834
    %s836 = sld [smem:[#allocation2 + $0xcb]]
    %v837 = vstv %s836
    %v838 = vmul.f32 %v308, %v837
    %v839 = vadd.f32 %v835, %v838
    %s840 = sld [smem:[#allocation2 + $0xcc]]
    %v841 = vstv %s840
    %v842 = vmul.f32 %v351, %v841
    %v843 = vadd.f32 %v839, %v842
    %s844 = sld [smem:[#allocation2 + $0xcd]]
    %v845 = vstv %s844
    %v846 = vmul.f32 %v394, %v845
    %v847 = vadd.f32 %v843, %v846
    %s848 = sld [smem:[#allocation2 + $0xce]]
    %v849 = vstv %s848
    %v850 = vmul.f32 %v437, %v849
    %v851 = vadd.f32 %v847, %v850
    %s852 = sld [smem:[#allocation2 + $0xcf]]
    %v853 = vstv %s852
    %v854 = vmul.f32 %v480, %v853
    %v855 = vadd.f32 %v851, %v854
    %s856 = sld [smem:[#allocation2 + $0xd0]]
    %v857 = vstv %s856
    %v858 = vmul.f32 %v523, %v857
    %v859 = vadd.f32 %v855, %v858
    %s860 = sld [smem:[#allocation2 + $0xd1]]
    %v861 = vstv %s860
    %v862 = vmul.f32 %v566, %v861
    %v863 = vadd.f32 %v859, %v862
    %s864 = sld [smem:[#allocation2 + $0xf6]]
    %v865 = vstv %s864
    %v866 = vadd.f32 %v863, %v865
    %v867 = vmax.f32 %v866, 0.0
    %s868 = sld [smem:[#allocation2 + $0xd2]]
    %v869 = vstv %s868
    %v870 = vmul.f32 %v179, %v869
    %s871 = sld [smem:[#allocation2 + $0xd3]]
    %v872 = vstv %s871
    %v873 = vmul.f32 %v222, %v872
    %v874 = vadd.f32 %v870, %v873
    %s875 = sld [smem:[#allocation2 + $0xd4]]
    %v876 = vstv %s875
    %v877 = vmul.f32 %v265, %v876
    %v878 = vadd.f32 %v874, %v877
    %s879 = sld [smem:[#allocation2 + $0xd5]]
    %v880 = vstv %s879
    %v881 = vmul.f32 %v308, %v880
    %v882 = vadd.f32 %v878, %v881
    %s883 = sld [smem:[#allocation2 + $0xd6]]
    %v884 = vstv %s883
    %v885 = vmul.f32 %v351, %v884
    %v886 = vadd.f32 %v882, %v885
    %s887 = sld [smem:[#allocation2 + $0xd7]]
    %v888 = vstv %s887
    %v889 = vmul.f32 %v394, %v888
    %v890 = vadd.f32 %v886, %v889
    %s891 = sld [smem:[#allocation2 + $0xd8]]
    %v892 = vstv %s891
    %v893 = vmul.f32 %v437, %v892
    %v894 = vadd.f32 %v890, %v893
    %s895 = sld [smem:[#allocation2 + $0xd9]]
    %v896 = vstv %s895
    %v897 = vmul.f32 %v480, %v896
    %v898 = vadd.f32 %v894, %v897
    %s899 = sld [smem:[#allocation2 + $0xda]]
    %v900 = vstv %s899
    %v901 = vmul.f32 %v523, %v900
    %v902 = vadd.f32 %v898, %v901
    %s903 = sld [smem:[#allocation2 + $0xdb]]
    %v904 = vstv %s903
    %v905 = vmul.f32 %v566, %v904
    %v906 = vadd.f32 %v902, %v905
    %s907 = sld [smem:[#allocation2 + $0xf7]]
    %v908 = vstv %s907
    %v909 = vadd.f32 %v906, %v908
    %v910 = vmax.f32 %v909, 0.0
    %s911 = sld [smem:[#allocation2 + $0xdc]]
    %v912 = vstv %s911
    %v913 = vmul.f32 %v179, %v912
    %s914 = sld [smem:[#allocation2 + $0xdd]]
    %v915 = vstv %s914
    %v916 = vmul.f32 %v222, %v915
    %v917 = vadd.f32 %v913, %v916
    %s918 = sld [smem:[#allocation2 + $0xde]]
    %v919 = vstv %s918
    %v920 = vmul.f32 %v265, %v919
    %v921 = vadd.f32 %v917, %v920
    %s922 = sld [smem:[#allocation2 + $0xdf]]
    %v923 = vstv %s922
    %v924 = vmul.f32 %v308, %v923
    %v925 = vadd.f32 %v921, %v924
    %s926 = sld [smem:[#allocation2 + $0xe0]]
    %v927 = vstv %s926
    %v928 = vmul.f32 %v351, %v927
    %v929 = vadd.f32 %v925, %v928
    %s930 = sld [smem:[#allocation2 + $0xe1]]
    %v931 = vstv %s930
    %v932 = vmul.f32 %v394, %v931
    %v933 = vadd.f32 %v929, %v932
    %s934 = sld [smem:[#allocation2 + $0xe2]]
    %v935 = vstv %s934
    %v936 = vmul.f32 %v437, %v935
    %v937 = vadd.f32 %v933, %v936
    %s938 = sld [smem:[#allocation2 + $0xe3]]
    %v939 = vstv %s938
    %v940 = vmul.f32 %v480, %v939
    %v941 = vadd.f32 %v937, %v940
    %s942 = sld [smem:[#allocation2 + $0xe4]]
    %v943 = vstv %s942
    %v944 = vmul.f32 %v523, %v943
    %v945 = vadd.f32 %v941, %v944
    %s946 = sld [smem:[#allocation2 + $0xe5]]
    %v947 = vstv %s946
    %v948 = vmul.f32 %v566, %v947
    %v949 = vadd.f32 %v945, %v948
    %s950 = sld [smem:[#allocation2 + $0xf8]]
    %v951 = vstv %s950
    %v952 = vadd.f32 %v949, %v951
    %v953 = vmax.f32 %v952, 0.0
    %s954 = sld [smem:[#allocation2 + $0xe6]]
    %v955 = vstv %s954
    %v956 = vmul.f32 %v179, %v955
    %s957 = sld [smem:[#allocation2 + $0xe7]]
    %v958 = vstv %s957
    %v959 = vmul.f32 %v222, %v958
    %v960 = vadd.f32 %v956, %v959
    %s961 = sld [smem:[#allocation2 + $0xe8]]
    %v962 = vstv %s961
    %v963 = vmul.f32 %v265, %v962
    %v964 = vadd.f32 %v960, %v963
    %s965 = sld [smem:[#allocation2 + $0xe9]]
    %v966 = vstv %s965
    %v967 = vmul.f32 %v308, %v966
    %v968 = vadd.f32 %v964, %v967
    %s969 = sld [smem:[#allocation2 + $0xea]]
    %v970 = vstv %s969
    %v971 = vmul.f32 %v351, %v970
    %v972 = vadd.f32 %v968, %v971
    %s973 = sld [smem:[#allocation2 + $0xeb]]
    %v974 = vstv %s973
    %v975 = vmul.f32 %v394, %v974
    %v976 = vadd.f32 %v972, %v975
    %s977 = sld [smem:[#allocation2 + $0xec]]
    %v978 = vstv %s977
    %v979 = vmul.f32 %v437, %v978
    %v980 = vadd.f32 %v976, %v979
    %s981 = sld [smem:[#allocation2 + $0xed]]
    %v982 = vstv %s981
    %v983 = vmul.f32 %v480, %v982
    %v984 = vadd.f32 %v980, %v983
    %s985 = sld [smem:[#allocation2 + $0xee]]
    %v986 = vstv %s985
    %v987 = vmul.f32 %v523, %v986
    %v988 = vadd.f32 %v984, %v987
    %s989 = sld [smem:[#allocation2 + $0xef]]
    %v990 = vstv %s989
    %v991 = vmul.f32 %v566, %v990
    %v992 = vadd.f32 %v988, %v991
    %s993 = sld [smem:[#allocation2 + $0xf9]]
    %v994 = vstv %s993
    %v995 = vadd.f32 %v992, %v994
    %v996 = vmax.f32 %v995, 0.0
    %s997 = sld [smem:[#allocation2 + $0xfa]]
    %v998 = vstv %s997
    %v999 = vmul.f32 %v609, %v998
    %s1000 = sld [smem:[#allocation2 + $0xfb]]
    %v1001 = vstv %s1000
    %v1002 = vmul.f32 %v652, %v1001
    %v1003 = vadd.f32 %v999, %v1002
    %s1004 = sld [smem:[#allocation2 + $0xfc]]
    %v1005 = vstv %s1004
    %v1006 = vmul.f32 %v695, %v1005
    %v1007 = vadd.f32 %v1003, %v1006
    %s1008 = sld [smem:[#allocation2 + $0xfd]]
    %v1009 = vstv %s1008
    %v1010 = vmul.f32 %v738, %v1009
    %v1011 = vadd.f32 %v1007, %v1010
    %s1012 = sld [smem:[#allocation2 + $0xfe]]
    %v1013 = vstv %s1012
    %v1014 = vmul.f32 %v781, %v1013
    %v1015 = vadd.f32 %v1011, %v1014
    %s1016 = sld [smem:[#allocation2 + $0xff]]
    %v1017 = vstv %s1016
    %v1018 = vmul.f32 %v824, %v1017
    %v1019 = vadd.f32 %v1015, %v1018
    %s1020 = sld [smem:[#allocation2 + $0x100]]
    %v1021 = vstv %s1020
    %v1022 = vmul.f32 %v867, %v1021
    %v1023 = vadd.f32 %v1019, %v1022
    %s1024 = sld [smem:[#allocation2 + $0x101]]
    %v1025 = vstv %s1024
    %v1026 = vmul.f32 %v910, %v1025
    %v1027 = vadd.f32 %v1023, %v1026
    %s1028 = sld [smem:[#allocation2 + $0x102]]
    %v1029 = vstv %s1028
    %v1030 = vmul.f32 %v953, %v1029
    %v1031 = vadd.f32 %v1027, %v1030
    %s1032 = sld [smem:[#allocation2 + $0x103]]
    %v1033 = vstv %s1032
    %v1034 = vmul.f32 %v996, %v1033
    %v1035 = vadd.f32 %v1031, %v1034
    %s1036 = sld [smem:[#allocation2 + $0x104]]
    %v1037 = vstv %s1036
    %v1038 = vadd.f32 %v1035, %v1037
    %1039 = vst [vmem:[%s2] sm:$0xff] %v1038
    // Predicated region
    $region14: #{mlp_forward.1} parent=1 // pred_check
      _
    $region15: #{mlp_forward.1} parent=1 // pred_check_branch
      %1041 = sbr.rel (0) target = $region17
    $region16: #{mlp_forward.1} parent=1 // pred_region
      _
    $region17: #{mlp_forward.1} parent=1 // pred_fallthru
      _
    // Predicated region
    $region18: #{mlp_forward.1} parent=1 // pred_check
      _
    $region19: #{mlp_forward.1} parent=1 // pred_check_branch
      %1043 = sbr.rel (0) target = $region21
    $region20: #{mlp_forward.1} parent=1 // pred_region
      _
    $region21: #{mlp_forward.1} parent=1 // pred_fallthru
      _
    %1044 = vsyncpa [#allocation3], 1

</llo_original>
